<compile_context>
chip_gen: v7x
topology: tpu7x:2x2x1
jax: 0.10.0
libtpu: 0.0.40
codegen_flags: <defaults>
</compile_context>

<pallas_src>
import functools

import jax
import jax.numpy as jnp
import numpy as np
from jax.experimental import pallas as pl
from jax.experimental.pallas import tpu as pltpu


def _round_up(x, m):
    return (x + m - 1) // m * m


def _choose_patch_tile(n_patches):
    """Row tile over the patch axis: multiple of 16 (bf16 packing), <= 512."""
    if n_patches <= 512:
        return _round_up(max(n_patches, 16), 16)
    best_tn, best_waste = 512, (-n_patches) % 512
    for cand in (512, 448, 384, 320, 256):
        waste = (-n_patches) % cand
        if waste < best_waste:
            best_tn, best_waste = cand, waste
    return best_tn


# ----------------------------------------------------------------------------
# Kernel: one [tn, Kp] x [Kp, Dp] MXU pass per grid step, f32 accumulation,
# fused (pos + bias) add, cast to the output dtype on store.
# ----------------------------------------------------------------------------
def _proj_kernel(x_ref, w_ref, pb_ref, o_ref):
    # x_ref : (1, tn, Kp) bf16   | w_ref : (Kp, Dp) bf16 (resident)
    # pb_ref: (tn, Dp)   f32     | o_ref : (1, tn, Dp) out_dtype
    acc = jnp.dot(x_ref[0], w_ref[...], preferred_element_type=jnp.float32)
    o_ref[0] = (acc + pb_ref[...]).astype(o_ref.dtype)


def _patch_matmul(patches, w_mat, pos_bias, *, tn, out_dtype):
    B, Np, Kp = patches.shape
    Dp = w_mat.shape[1]
    grid = (B, Np // tn)
    out_bytes = jnp.dtype(out_dtype).itemsize

    # VMEM working set: double-buffered x & pos & out, single-buffered weight.
    vmem_need = (2 * tn * Kp * 2          # x tiles (bf16)
                 + Kp * Dp * 2            # resident weight (bf16)
                 + 2 * tn * Dp * 4        # pos+bias tiles (f32)
                 + 2 * tn * Dp * out_bytes)
    vmem_limit = int(min(max(2 * vmem_need, 32 << 20), 56 << 20))

    cost = pl.CostEstimate(
        flops=2 * B * Np * Kp * Dp,
        transcendentals=0,
        bytes_accessed=B * Np * Kp * 2 + Kp * Dp * 2
                       + Np * Dp * 4 + B * Np * Dp * out_bytes,
    )

    def build(single_buffer_weight):
        w_kwargs = {"pipeline_mode": pl.Buffered(1)} if single_buffer_weight else {}
        return pl.pallas_call(
            _proj_kernel,
            out_shape=jax.ShapeDtypeStruct((B, Np, Dp), out_dtype),
            grid=grid,
            in_specs=[
                pl.BlockSpec((1, tn, Kp), lambda b, j: (b, j, 0)),
                pl.BlockSpec((Kp, Dp), lambda b, j: (0, 0), **w_kwargs),
                pl.BlockSpec((tn, Dp), lambda b, j: (j, 0)),
            ],
            out_specs=pl.BlockSpec((1, tn, Dp), lambda b, j: (b, j, 0)),
            compiler_params=pltpu.CompilerParams(
                dimension_semantics=("parallel", "parallel"),
                vmem_limit_bytes=vmem_limit,
            ),
            cost_estimate=cost,
        )

    try:
        return build(True)(patches, w_mat, pos_bias)
    except Exception:
        # TODO(synk): Buffered(1) single-buffering of the resident weight is a
        # pure VMEM optimization; fall back if this JAX build rejects
        # pipeline_mode on pallas_call BlockSpecs.
        return build(False)(patches, w_mat, pos_bias)


# ----------------------------------------------------------------------------
# Parameter preparation (weight-load time): transpose/pad/cast the conv weight,
# fuse conv bias into the patch positional embeddings, precompute cls + pos[0].
# ----------------------------------------------------------------------------
def prepare_linear_projection_params(conv_w, conv_b, cls_token, pos_emb, *,
                                     patch_size=None,
                                     matmul_dtype=jnp.bfloat16,
                                     out_dtype=jnp.float32):
    D, C, P, _ = conv_w.shape
    if patch_size is None:
        patch_size = P
    K = C * P * P
    N = pos_emb.shape[1] - 1

    Kp = _round_up(K, 128)
    Dp = _round_up(D, 128)
    tn = _choose_patch_tile(N)
    Np = _round_up(N, tn)

    # Conv2d(kernel=P, stride=P) weight as a [Kp, Dp] matmul RHS, (c, ph, pw)
    # flatten order to match the im2col below; bf16 operands, zero-padded.
    w_mat = conv_w.reshape(D, K).T.astype(matmul_dtype)
    w_mat = jnp.pad(w_mat, ((0, Kp - K), (0, Dp - D)))

    # Fused per-patch additive term: pos_emb[1:] + conv bias, kept in f32 so
    # the kernel's add happens on the f32 accumulator.
    pos = pos_emb.reshape(N + 1, D).astype(jnp.float32)
    pos_bias = pos[1:] + conv_b.astype(jnp.float32)[None, :]
    pos_bias = jnp.pad(pos_bias, ((0, Np - N), (0, Dp - D)))

    # Batch-invariant cls row: cls_token + pos_emb[0].
    row0 = (cls_token.reshape(1, D).astype(jnp.float32) + pos[0:1]).astype(out_dtype)

    return dict(w_mat=w_mat, pos_bias=pos_bias, row0=row0,
                patch_size=patch_size, D=D, K=K, Kp=Kp, Dp=Dp,
                N=N, Np=Np, tn=tn,
                matmul_dtype=matmul_dtype, out_dtype=out_dtype)


def linear_projection_apply(x_nchw, params):
    """x_nchw: [B, C, H, W] -> [B, N+1, D] in params['out_dtype']."""
    B, C, H, W = x_nchw.shape
    P = params["patch_size"]
    D, K, Kp = params["D"], params["K"], params["Kp"]
    N, Np, tn = params["N"], params["Np"], params["tn"]
    nH, nW = H // P, W // P
    assert nH * nW == N, "image size inconsistent with pos_embeddings"

    # im2col: non-overlapping patches, (c, ph, pw) flatten order, bf16.
    patches = (
        x_nchw.reshape(B, C, nH, P, nW, P)
        .transpose(0, 2, 4, 1, 3, 5)              # [B, nH, nW, C, P, P]
        .reshape(B, N, K)
        .astype(params["matmul_dtype"])
    )
    patches = jnp.pad(patches, ((0, 0), (0, Np - N), (0, Kp - K)))

    out = _patch_matmul(patches, params["w_mat"], params["pos_bias"],
                        tn=tn, out_dtype=params["out_dtype"])    # [B, Np, Dp]

    proj = out[:, :N, :D]                                        # drop padding
    row0 = jnp.broadcast_to(params["row0"][None], (B, 1, D))
    return jnp.concatenate([row0, proj], axis=1)                 # [B, N+1, D]


def linear_projection(x_nchw, conv_w, conv_b, cls_token, pos_emb, patch_size,
                      *, matmul_dtype=jnp.bfloat16, out_dtype=jnp.float32):
    params = prepare_linear_projection_params(
        conv_w, conv_b, cls_token, pos_emb, patch_size=patch_size,
        matmul_dtype=matmul_dtype, out_dtype=out_dtype)
    return linear_projection_apply(x_nchw, params)


# ----------------------------------------------------------------------------
# Pure-JAX reference (same bf16 matmul operands / f32 accumulation).
# ----------------------------------------------------------------------------
def _reference(x_nchw, conv_w, conv_b, cls_token, pos_emb, patch_size,
               matmul_dtype=jnp.bfloat16):
    B, C, H, W = x_nchw.shape
    P = patch_size
    D = conv_w.shape[0]
    nH, nW = H // P, W // P
    N = nH * nW
    K = C * P * P
    patches = (
        x_nchw.reshape(B, C, nH, P, nW, P)
        .transpose(0, 2, 4, 1, 3, 5)
        .reshape(B, N, K)
        .astype(matmul_dtype)
    )
    w = conv_w.reshape(D, K).T.astype(matmul_dtype)
    proj = jnp.einsum("bnk,kd->bnd", patches, w,
                      preferred_element_type=jnp.float32)
    proj = proj + conv_b[None, None, :].astype(jnp.float32)
    cls = jnp.broadcast_to(cls_token, (B, 1, D)).astype(jnp.float32)
    seq = jnp.concatenate([cls, proj], axis=1)
    return seq + pos_emb.astype(jnp.float32)


if __name__ == "__main__":
    # Small config consistent with the module defaults:
    # image_size=32, patch_size=16, in_channels=3, embed_dim=64.
    B, C, IMG, P, D = 2, 3, 32, 16, 64
    N = (IMG // P) ** 2        # 4 patches -> sequence length 5

    key = jax.random.PRNGKey(0)
    kx, kw, kb, kc, kp = jax.random.split(key, 5)

    x = jax.random.normal(kx, (B, C, IMG, IMG), dtype=jnp.float32)
    conv_w = jax.random.normal(kw, (D, C, P, P), dtype=jnp.float32) * 0.02
    conv_b = jax.random.normal(kb, (D,), dtype=jnp.float32) * 0.02
    cls_token = jax.random.normal(kc, (1, 1, D), dtype=jnp.float32)
    pos_emb = jax.random.normal(kp, (1, N + 1, D), dtype=jnp.float32)

    ref = _reference(x, conv_w, conv_b, cls_token, pos_emb, P)

    # f32 output (matches the PyTorch module dtype exactly).
    params_f32 = prepare_linear_projection_params(
        conv_w, conv_b, cls_token, pos_emb, patch_size=P)
    out = jax.block_until_ready(linear_projection_apply(x, params_f32))
    assert out.shape == (B, N + 1, D), out.shape
    assert out.dtype == jnp.float32, out.dtype
    np.testing.assert_allclose(np.asarray(out), np.asarray(ref),
                               atol=2e-3, rtol=2e-3)

    # bf16 output path (perf feedback: halves HBM writeback when downstream
    # ViT blocks are bf16).  Looser tolerance for the bf16 store rounding.
    params_bf16 = prepare_linear_projection_params(
        conv_w, conv_b, cls_token, pos_emb, patch_size=P,
        out_dtype=jnp.bfloat16)
    out_bf16 = jax.block_until_ready(linear_projection_apply(x, params_bf16))
    assert out_bf16.shape == (B, N + 1, D), out_bf16.shape
    assert out_bf16.dtype == jnp.bfloat16, out_bf16.dtype
    np.testing.assert_allclose(np.asarray(out_bf16, dtype=np.float32),
                               np.asarray(ref), atol=5e-2, rtol=5e-2)

    print("KERNEL_OK")
</pallas_src>

<mosaic_0001>
module attributes {stable_mosaic.version = 11 : i64} {
  func.func @_proj_kernel(%arg0: i32, %arg1: i32, %arg2: memref<1x16x768xbf16, #tpu.memory_space<vmem>>, %arg3: memref<768x128xbf16, #tpu.memory_space<vmem>>, %arg4: memref<16x128xf32, #tpu.memory_space<vmem>>, %arg5: memref<1x16x128xf32, #tpu.memory_space<vmem>>) attributes {dimension_semantics = [#tpu.dimension_semantics<parallel>, #tpu.dimension_semantics<parallel>], iteration_bounds = array<i64: 2, 1>, scalar_prefetch = 0 : i64, scratch_operands = 0 : i64, tpu.core_type = #tpu.core_type<tc>, window_params = [{transform_indices = @transform_0, window_bounds = array<i64: 1, 16, 768>}, {pipeline_mode = #tpu.pipeline_mode<synchronous>, transform_indices = @transform_1, window_bounds = array<i64: 768, 128>}, {transform_indices = @transform_2, window_bounds = array<i64: 16, 128>}, {transform_indices = @transform_3, window_bounds = array<i64: 1, 16, 128>}]} {
    %c0 = arith.constant 0 : index
    %c0_0 = arith.constant 0 : index
    %c0_1 = arith.constant 0 : index
    %0 = vector.load %arg2[%c0, %c0_0, %c0_1] : memref<1x16x768xbf16, #tpu.memory_space<vmem>>, vector<1x16x768xbf16>
    %1 = vector.shape_cast %0 : vector<1x16x768xbf16> to vector<16x768xbf16>
    %c0_2 = arith.constant 0 : index
    %c0_3 = arith.constant 0 : index
    %2 = vector.load %arg3[%c0_2, %c0_3] : memref<768x128xbf16, #tpu.memory_space<vmem>>, vector<768x128xbf16>
    %cst = arith.constant dense<0.000000e+00> : vector<16x128xf32>
    %3 = tpu.matmul %1, %2, %cst {dimension_numbers = #tpu.dot_dimension_numbers<[1], [0], [0], [1], [0, 0, 1, 1], [], []>} : vector<16x768xbf16>, vector<768x128xbf16>, vector<16x128xf32> -> vector<16x128xf32>
    %c0_4 = arith.constant 0 : index
    %c0_5 = arith.constant 0 : index
    %4 = vector.load %arg4[%c0_4, %c0_5] : memref<16x128xf32, #tpu.memory_space<vmem>>, vector<16x128xf32>
    %5 = arith.addf %3, %4 : vector<16x128xf32>
    %c0_6 = arith.constant 0 : index
    %c0_7 = arith.constant 0 : index
    %c0_8 = arith.constant 0 : index
    %6 = vector.load %arg5[%c0_6, %c0_7, %c0_8] : memref<1x16x128xf32, #tpu.memory_space<vmem>>, vector<1x16x128xf32>
    %7 = vector.shape_cast %6 : vector<1x16x128xf32> to vector<16x128xf32>
    %8 = vector.shape_cast %5 : vector<16x128xf32> to vector<1x16x128xf32>
    tpu.vector_store %arg5[%c0_6, %c0_7, %c0_8], %8 {strides = array<i32>} : memref<1x16x128xf32, #tpu.memory_space<vmem>>, vector<1x16x128xf32>,
    return
  }
  func.func @transform_0(%arg0: i32, %arg1: i32) -> (i32, i32, i32) {
    %c0_i32 = arith.constant 0 : i32
    %c0_i32_0 = arith.constant 0 : i32
    return %arg0, %arg1, %c0_i32 : i32, i32, i32
  }
  func.func @transform_1(%arg0: i32, %arg1: i32) -> (i32, i32) {
    %c0_i32 = arith.constant 0 : i32
    %c0_i32_0 = arith.constant 0 : i32
    %c0_i32_1 = arith.constant 0 : i32
    return %c0_i32, %c0_i32_0 : i32, i32
  }
  func.func @transform_2(%arg0: i32, %arg1: i32) -> (i32, i32) {
    %c0_i32 = arith.constant 0 : i32
    %c0_i32_0 = arith.constant 0 : i32
    return %arg1, %c0_i32 : i32, i32
  }
  func.func @transform_3(%arg0: i32, %arg1: i32) -> (i32, i32, i32) {
    %c0_i32 = arith.constant 0 : i32
    %c0_i32_0 = arith.constant 0 : i32
    return %arg0, %arg1, %c0_i32 : i32, i32, i32
  }
}

module attributes {stable_mosaic.version = 11 : i64} {
  func.func @_proj_kernel(%arg0: i32, %arg1: i32, %arg2: memref<1x16x768xbf16, #tpu.memory_space<vmem>>, %arg3: memref<768x128xbf16, #tpu.memory_space<vmem>>, %arg4: memref<16x128xf32, #tpu.memory_space<vmem>>, %arg5: memref<1x16x128xf32, #tpu.memory_space<vmem>>) attributes {dimension_semantics = [#tpu.dimension_semantics<parallel>, #tpu.dimension_semantics<parallel>], iteration_bounds = array<i64: 2, 1>, scalar_prefetch = 0 : i64, scratch_operands = 0 : i64, tpu.core_type = #tpu.core_type<tc>, window_params = [{transform_indices = @transform_0, window_bounds = array<i64: 1, 16, 768>}, {pipeline_mode = #tpu.pipeline_mode<synchronous>, transform_indices = @transform_1, window_bounds = array<i64: 768, 128>}, {transform_indices = @transform_2, window_bounds = array<i64: 16, 128>}, {transform_indices = @transform_3, window_bounds = array<i64: 1, 16, 128>}]} {
    %c0 = arith.constant 0 : index
    %c0_0 = arith.constant 0 : index
    %c0_1 = arith.constant 0 : index
    %0 = vector.load %arg2[%c0, %c0_0, %c0_1] : memref<1x16x768xbf16, #tpu.memory_space<vmem>>, vector<1x16x768xbf16>
    %1 = vector.shape_cast %0 : vector<1x16x768xbf16> to vector<16x768xbf16>
    %c0_2 = arith.constant 0 : index
    %c0_3 = arith.constant 0 : index
    %2 = vector.load %arg3[%c0_2, %c0_3] : memref<768x128xbf16, #tpu.memory_space<vmem>>, vector<768x128xbf16>
    %cst = arith.constant dense<0.000000e+00> : vector<16x128xf32>
    %3 = tpu.matmul %1, %2, %cst {dimension_numbers = #tpu.dot_dimension_numbers<[1], [0], [0], [1], [0, 0, 1, 1], [], []>} : vector<16x768xbf16>, vector<768x128xbf16>, vector<16x128xf32> -> vector<16x128xf32>
    %c0_4 = arith.constant 0 : index
    %c0_5 = arith.constant 0 : index
    %4 = vector.load %arg4[%c0_4, %c0_5] : memref<16x128xf32, #tpu.memory_space<vmem>>, vector<16x128xf32>
    %5 = arith.addf %3, %4 : vector<16x128xf32>
    %c0_6 = arith.constant 0 : index
    %c0_7 = arith.constant 0 : index
    %c0_8 = arith.constant 0 : index
    %6 = vector.load %arg5[%c0_6, %c0_7, %c0_8] : memref<1x16x128xf32, #tpu.memory_space<vmem>>, vector<1x16x128xf32>
    %7 = vector.shape_cast %6 : vector<1x16x128xf32> to vector<16x128xf32>
    %8 = vector.shape_cast %5 : vector<16x128xf32> to vector<1x16x128xf32>
    tpu.vector_store %arg5[%c0_6, %c0_7, %c0_8], %8 {strides = array<i32>} : memref<1x16x128xf32, #tpu.memory_space<vmem>>, vector<1x16x128xf32>,
    return
  }
  func.func @transform_0(%arg0: i32, %arg1: i32) -> (i32, i32, i32) {
    %c0_i32 = arith.constant 0 : i32
    %c0_i32_0 = arith.constant 0 : i32
    return %arg0, %arg1, %c0_i32 : i32, i32, i32
  }
  func.func @transform_1(%arg0: i32, %arg1: i32) -> (i32, i32) {
    %c0_i32 = arith.constant 0 : i32
    %c0_i32_0 = arith.constant 0 : i32
    %c0_i32_1 = arith.constant 0 : i32
    return %c0_i32, %c0_i32_0 : i32, i32
  }
  func.func @transform_2(%arg0: i32, %arg1: i32) -> (i32, i32) {
    %c0_i32 = arith.constant 0 : i32
    %c0_i32_0 = arith.constant 0 : i32
    return %arg1, %c0_i32 : i32, i32
  }
  func.func @transform_3(%arg0: i32, %arg1: i32) -> (i32, i32, i32) {
    %c0_i32 = arith.constant 0 : i32
    %c0_i32_0 = arith.constant 0 : i32
    return %arg0, %arg1, %c0_i32 : i32, i32, i32
  }
}

</mosaic_0001>

<llo_original>
// kernel: tpu_custom_call.1
$region0: #{tpu_custom_call.1}
  #allocation0 [shape = 'u32[]', space=smem, size = 0x4, offset = 0x4, fixed_abs, tag = 'smem constant byte address 0x4 - core index']
  #allocation1 [shape = 'u32[144,128]{1,0:T(1,128)}', space=vmem, size = 0x12000, scoped, tag = 'internal scratch']
  %s0 = inlined_call_operand.hbm [shape: bf16[2,16,768], index: 0, kind: input, shape index: {}]
  %s1 = inlined_call_operand.hbm [shape: bf16[768,128], index: 1, kind: input, shape index: {}]
  %s2 = inlined_call_operand.hbm [shape: f32[16,128], index: 2, kind: input, shape index: {}]
  %s3 = inlined_call_operand.hbm [shape: f32[2,16,128], index: 3, kind: output, shape index: {}]
  %s4 = sld [smem:[#allocation0]]
  $region57: #{tpu_custom_call.1} parent=0
    _
  %s6 = ssub.s32 1, %s4
  %s7 = scalar_select 0, %s6, %s4
  $region1: #{tpu_custom_call.1} parent=0
    #allocation2 [shape = 'u8[49152]{0}', space=vmem, size = 0xc000, scoped, tag = 'input window, operand 0']
    #allocation3 [shape = 's32[2]{0}', space=sflag, size = 0x8, scoped, tag = 'scoped memory for tpu_custom_call.1']
    #allocation4 [shape = 's32[2]{0}', space=sflag, size = 0x8, scoped, tag = 'scoped memory for tpu_custom_call.1']
    #allocation5 [shape = 'u8[196608]{0}', space=vmem, size = 0x30000, scoped, tag = 'input window, operand 1, single buffered']
    #allocation6 [shape = 's32[1]{0}', space=sflag, size = 0x4, scoped, tag = 'scoped memory for tpu_custom_call.1']
    #allocation7 [shape = 'u8[8192]{0}', space=vmem, size = 0x2000, scoped, tag = 'input window, operand 2, single buffered']
    #allocation8 [shape = 'u8[16384]{0}', space=vmem, size = 0x4000, scoped, tag = 'output window, operand 0']
    %8 = vsyncpa [#allocation3], 0
    %s9 = scalar_lea.sflag [#allocation3], 1
    %10 = vsyncpa %s9, 0
    %11 = vsyncpa [#allocation6], 0
    %12 = vsyncpa [#allocation4], 0
    %s13 = scalar_lea.sflag [#allocation4], 1
    %14 = vsyncpa %s13, 0
    loop: start=0, step=1, limit=4
    $region2: #{tpu_custom_call.1} parent=1 // loop_pre_header
      _
    $region3: #{tpu_custom_call.1} parent=1 // loop_header
      %s16 = sphi 0, %s20
      %p17 = scmp.ge.s32.totalorder %s16, 4
      %s23 = sphi 0, %s35
      %s24 = sphi 0, %s31
      %s25 = sphi 0, %s23
      %s26 = sphi 0, %s24
      %s27 = sphi 0, %s25
      %s28 = sphi 0, %s26
      %s40 = sphi 0, %s42
      %s43 = sphi 0, %s40
      %s44 = sphi 0, %s43
      %s60 = sphi 0, %s44
      %s64 = sphi 0, %s64
      %s66 = sphi 0, %s64
      %s67 = sphi 0, %s66
      %s81 = sphi 0, %s67
      %s87 = sphi 0, %s89
      %s90 = sphi 0, %s87
      %s91 = sphi 0, %s90
      %s107 = sphi 0, %s91
      %s115 = sphi 0, %s117
      %s118 = sphi 0, %s115
      %s119 = sphi 0, %s118
      %s135 = sphi 0, %s119
    $region4: #{tpu_custom_call.1} parent=1 // loop_header_branch
      %19 = sbr.rel (%p17) target = $region8
    $region5: #{tpu_custom_call.1} parent=1 // loop_body
      %s21 = ssub.s32 %s16, 1
      %s22 = ssub.s32 %s16, 2
      %s29 = sadd.s32 1, %s24
      %p30 = scmp.ge.s32.totalorder %s29, 1
      %s31 = scalar_select %p30, 0, %s29
      %s32 = sadd.s32 1, %s23
      %s33 = scalar_select %p30, %s32, %s23
      %p34 = scmp.ge.s32.totalorder %s33, 2
      %s35 = scalar_select %p34, 0, %s33
      %s36 = ssub.s32 %s23, %s35
      %s37 = ssub.s32 %s24, %s31
      %s38 = sor.u32 %s36, %s37
      %p39 = scmp.eq.s32.totalorder %s38, 0
      %s41 = sadd.s32 %s40, 1
      %s42 = scalar_select %p39, %s40, %s41
      %p45 = pneg %p39
      %p46 = scmp.eq.s32.totalorder %s16, 1
      %p47 = por %p45, %p46
      %p48 = scmp.ne.s32.totalorder %s40, %s43
      %p49 = scmp.eq.s32.totalorder %s16, 0
      %p50 = por %p48, %p49
      %p51 = scmp.ne.s32.totalorder %s40, %s43
      %p52 = scmp.eq.s32.totalorder %s21, 1
      %p53 = por %p51, %p52
      %p54 = scmp.ne.s32.totalorder %s43, %s44
      %p55 = scmp.eq.s32.totalorder %s21, 0
      %p56 = por %p54, %p55
      %p57 = scmp.ne.s32.totalorder %s43, %s44
      %p58 = scmp.eq.s32.totalorder %s22, 1
      %p59 = por %p57, %p58
      %p61 = scmp.ne.s32.totalorder %s44, %s60
      %p62 = scmp.eq.s32.totalorder %s22, 0
      %p63 = por %p61, %p62
      %s65 = sadd.s32 %s64, 1
      %p68 = scmp.eq.s32.totalorder %s16, 1
      %p69 = scmp.ne.s32.totalorder %s64, %s66
      %p70 = scmp.eq.s32.totalorder %s16, 0
      %p71 = por %p69, %p70
      %p72 = scmp.ne.s32.totalorder %s64, %s66
      %p73 = scmp.eq.s32.totalorder %s21, 1
      %p74 = por %p72, %p73
      %p75 = scmp.ne.s32.totalorder %s66, %s67
      %p76 = scmp.eq.s32.totalorder %s21, 0
      %p77 = por %p75, %p76
      %p78 = scmp.ne.s32.totalorder %s66, %s67
      %p79 = scmp.eq.s32.totalorder %s22, 1
      %p80 = por %p78, %p79
      %p82 = scmp.ne.s32.totalorder %s67, %s81
      %p83 = scmp.eq.s32.totalorder %s22, 0
      %p84 = por %p82, %p83
      %s85 = ssub.s32 %s24, %s31
      %p86 = scmp.eq.s32.totalorder %s85, 0
      %s88 = sadd.s32 %s87, 1
      %s89 = scalar_select %p86, %s87, %s88
      %p92 = pneg %p86
      %p93 = scmp.eq.s32.totalorder %s16, 1
      %p94 = por %p92, %p93
      %p95 = scmp.ne.s32.totalorder %s87, %s90
      %p96 = scmp.eq.s32.totalorder %s16, 0
      %p97 = por %p95, %p96
      %p98 = scmp.ne.s32.totalorder %s87, %s90
      %p99 = scmp.eq.s32.totalorder %s21, 1
      %p100 = por %p98, %p99
      %p101 = scmp.ne.s32.totalorder %s90, %s91
      %p102 = scmp.eq.s32.totalorder %s21, 0
      %p103 = por %p101, %p102
      %p104 = scmp.ne.s32.totalorder %s90, %s91
      %p105 = scmp.eq.s32.totalorder %s22, 1
      %p106 = por %p104, %p105
      %p108 = scmp.ne.s32.totalorder %s91, %s107
      %p109 = scmp.eq.s32.totalorder %s22, 0
      %p110 = por %p108, %p109
      %s111 = ssub.s32 %s23, %s35
      %s112 = ssub.s32 %s24, %s31
      %s113 = sor.u32 %s111, %s112
      %p114 = scmp.eq.s32.totalorder %s113, 0
      %s116 = sadd.s32 %s115, 1
      %s117 = scalar_select %p114, %s115, %s116
      %p120 = pneg %p114
      %p121 = scmp.eq.s32.totalorder %s16, 1
      %p122 = por %p120, %p121
      %p123 = scmp.ne.s32.totalorder %s115, %s118
      %p124 = scmp.eq.s32.totalorder %s16, 0
      %p125 = por %p123, %p124
      %p126 = scmp.ne.s32.totalorder %s115, %s118
      %p127 = scmp.eq.s32.totalorder %s21, 1
      %p128 = por %p126, %p127
      %p129 = scmp.ne.s32.totalorder %s118, %s119
      %p130 = scmp.eq.s32.totalorder %s21, 0
      %p131 = por %p129, %p130
      %p132 = scmp.ne.s32.totalorder %s118, %s119
      %p133 = scmp.eq.s32.totalorder %s22, 1
      %p134 = por %p132, %p133
      %p136 = scmp.ne.s32.totalorder %s119, %s135
      %p137 = scmp.eq.s32.totalorder %s22, 0
      %p138 = por %p136, %p137
      %p139 = scmp.le.s32.totalorder 1, %s16
      %p140 = scmp.lt.s32.totalorder %s16, 3
      %p141 = pnand %p139, %p140
      %p142 = pneg %p141
      // Predicated region
      $region9: #{tpu_custom_call.1} parent=5 // pred_check
        _
      $region10: #{tpu_custom_call.1} parent=5 // pred_check_branch
        %144 = sbr.rel (%p141) target = $region12
      $region11: #{tpu_custom_call.1} parent=5 // pred_region
        %s145 = ssub.s32 %s16, 1
        // Predicated region
        $region13: #{tpu_custom_call.1} parent=11 // pred_check
          %p146 = pneg %p77
        $region14: #{tpu_custom_call.1} parent=11 // pred_check_branch
          %148 = sbr.rel (%p146) target = $region16
        $region15: #{tpu_custom_call.1} parent=11 // pred_region
          %s150 = ssub.s32 6144, 6144
          %151 = vsyncadd [#allocation6], %s150
          %s152 = sshll.u32 [#allocation5], 4
          %s153 = int_to_ptr.vmem [resolvable:$true] %s152
          %158 = dma.hbm_to_vmem [thread:$0]  %s1, 6144, %s153, [#allocation6], 64, 64, 4
        $region16: #{tpu_custom_call.1} parent=11 // pred_fallthru
          _
        // Predicated region
        $region17: #{tpu_custom_call.1} parent=11 // pred_check
          %p159 = pneg %p103
        $region18: #{tpu_custom_call.1} parent=11 // pred_check_branch
          %161 = sbr.rel (%p159) target = $region20
        $region19: #{tpu_custom_call.1} parent=11 // pred_region
          %s162 = smul.u32 2, %s26
          %s164 = ssub.s32 256, 256
          %165 = vsyncadd [#allocation6], %s164
          %s166 = smul.addr %s162, 128
          %s167 = scalar_lea.hbm %s2, %s166
          %s168 = sshll.u32 [#allocation7], 4
          %s169 = int_to_ptr.vmem [resolvable:$true] %s168
          %174 = dma.hbm_to_vmem [thread:$0]  %s167, 256, %s169, [#allocation6], 128, 128, 8
        $region20: #{tpu_custom_call.1} parent=11 // pred_fallthru
          _
      $region12: #{tpu_custom_call.1} parent=5 // pred_fallthru
        _
      %p175 = scmp.lt.s32.totalorder %s16, 2
      // Predicated region
      $region21: #{tpu_custom_call.1} parent=5 // pred_check
        %p176 = pneg %p175
      $region22: #{tpu_custom_call.1} parent=5 // pred_check_branch
        %178 = sbr.rel (%p176) target = $region24
      $region23: #{tpu_custom_call.1} parent=5 // pred_region
        // Predicated region
        $region25: #{tpu_custom_call.1} parent=23 // pred_check
          %p179 = pneg %p50
        $region26: #{tpu_custom_call.1} parent=23 // pred_check_branch
          %181 = sbr.rel (%p179) target = $region28
        $region27: #{tpu_custom_call.1} parent=23 // pred_region
          %s182 = sand.u32 %s40, 1
          %s183 = scalar_lea.sflag [#allocation3], %s182
          %s184 = sand.u32 %s40, 1
          %s185 = smul.addr %s184, 48
          %s186 = scalar_lea.vmem [#allocation2], %s185
          %s187 = smul.u32 2, %s24
          %s189 = ssub.s32 768, 768
          %190 = vsyncadd %s183, %s189
          %s191 = smul.addr %s187, 6
          %s192 = smul.addr %s23, 12
          %s193 = sadd.s32 %s191, %s192
          %s194 = smul.addr %s193, 64
          %s195 = scalar_lea.hbm %s0, %s194
          %s196 = sshll.u32 %s186, 4
          %s197 = int_to_ptr.vmem [resolvable:$true] %s196
          %202 = dma.hbm_to_vmem [thread:$0]  %s195, 768, %s197, %s183, 384, 384, 24
        $region28: #{tpu_custom_call.1} parent=23 // pred_fallthru
          _
      $region24: #{tpu_custom_call.1} parent=5 // pred_fallthru
        _
      %p203 = scmp.le.s32.totalorder 1, %s16
      %p204 = scmp.lt.s32.totalorder %s16, 3
      %p205 = pnand %p203, %p204
      %p206 = pneg %p205
      // Predicated region
      $region29: #{tpu_custom_call.1} parent=5 // pred_check
        _
      $region30: #{tpu_custom_call.1} parent=5 // pred_check_branch
        %208 = sbr.rel (%p205) target = $region32
      $region31: #{tpu_custom_call.1} parent=5 // pred_region
        %s209 = ssub.s32 %s16, 1
        %s210 = sand.u32 %s43, 1
        %s211 = scalar_lea.sflag [#allocation3], %s210
        %s212 = sand.u32 %s43, 1
        %s213 = smul.addr %s212, 48
        %s214 = scalar_lea.vmem [#allocation2], %s213
        // Predicated region
        $region33: #{tpu_custom_call.1} parent=31 // pred_check
          %p215 = pneg %p56
        $region34: #{tpu_custom_call.1} parent=31 // pred_check_branch
          %217 = sbr.rel (%p215) target = $region36
        $region35: #{tpu_custom_call.1} parent=31 // pred_region
          %218 = dma.done %s211, 768
        $region36: #{tpu_custom_call.1} parent=31 // pred_fallthru
          _
        // Predicated region
        $region37: #{tpu_custom_call.1} parent=31 // pred_check
          %p219 = pneg %p77
        $region38: #{tpu_custom_call.1} parent=31 // pred_check_branch
          %221 = sbr.rel (%p219) target = $region40
        $region39: #{tpu_custom_call.1} parent=31 // pred_region
          %222 = dma.done [#allocation6], 6144
        $region40: #{tpu_custom_call.1} parent=31 // pred_fallthru
          _
        // Predicated region
        $region41: #{tpu_custom_call.1} parent=31 // pred_check
          %p223 = pneg %p103
        $region42: #{tpu_custom_call.1} parent=31 // pred_check_branch
          %225 = sbr.rel (%p223) target = $region44
        $region43: #{tpu_custom_call.1} parent=31 // pred_region
          %226 = dma.done [#allocation6], 256
        $region44: #{tpu_custom_call.1} parent=31 // pred_fallthru
          _
        %s227 = sand.u32 %s43, 1
        %s228 = scalar_lea.sflag [#allocation3], %s227
        %s229 = sand.u32 %s43, 1
        %s230 = smul.addr %s229, 48
        %s231 = scalar_lea.vmem [#allocation2], %s230
        %p232 = pneg %p56
        %p233 = pneg %p53
        %p234 = pneg %p77
        %p235 = pneg %p74
        %p236 = pneg %p103
        %p237 = pneg %p100
        %p238 = pneg %p131
        %p239 = pneg %p128
        %s240 = sand.u32 %s118, 1
        %s241 = scalar_lea.sflag [#allocation4], %s240
        %s242 = sand.u32 %s118, 1
        %s243 = smul.addr %s242, 16
        %s244 = scalar_lea.vmem [#allocation8], %s243
        %s245 = smul.u32 2, %s26
        %s246 = smul.u32 2, %s26
        %s247 = smul.u32 2, %s26
        %v249 = vld [vmem:[%s214] sm:$0xff]
        %v250 = vld [vmem:[%s214 + $0x8] sm:$0xff]
        %v251 = vld [vmem:[%s214 + $0x10] sm:$0xff]
        %v252 = vld [vmem:[%s214 + $0x18] sm:$0xff]
        %v253 = vld [vmem:[%s214 + $0x20] sm:$0xff]
        %v254 = vld [vmem:[%s214 + $0x28] sm:$0xff]
        %v255 = vld [vmem:[#allocation5] sm:$0xf]
        %v256 = vld [vmem:[#allocation5 + $0x4] sm:$0xf]
        %v257 = vld [vmem:[#allocation5 + $0x8] sm:$0xf]
        %v258 = vld [vmem:[#allocation5 + $0xc] sm:$0xf]
        %v259 = vld [vmem:[#allocation5 + $0x10] sm:$0xf]
        %v260 = vld [vmem:[#allocation5 + $0x14] sm:$0xf]
        %v261 = vld [vmem:[#allocation5 + $0x18] sm:$0xf]
        %v262 = vld [vmem:[#allocation5 + $0x1c] sm:$0xf]
        %v263 = vld [vmem:[#allocation5 + $0x20] sm:$0xf]
        %v264 = vld [vmem:[#allocation5 + $0x24] sm:$0xf]
        %v265 = vld [vmem:[#allocation5 + $0x28] sm:$0xf]
        %v266 = vld [vmem:[#allocation5 + $0x2c] sm:$0xf]
        %v267 = vld [vmem:[#allocation5 + $0x30] sm:$0xf]
        %v268 = vld [vmem:[#allocation5 + $0x34] sm:$0xf]
        %v269 = vld [vmem:[#allocation5 + $0x38] sm:$0xf]
        %v270 = vld [vmem:[#allocation5 + $0x3c] sm:$0xf]
        %v271 = vld [vmem:[#allocation5 + $0x40] sm:$0xf]
        %v272 = vld [vmem:[#allocation5 + $0x44] sm:$0xf]
        %v273 = vld [vmem:[#allocation5 + $0x48] sm:$0xf]
        %v274 = vld [vmem:[#allocation5 + $0x4c] sm:$0xf]
        %v275 = vld [vmem:[#allocation5 + $0x50] sm:$0xf]
        %v276 = vld [vmem:[#allocation5 + $0x54] sm:$0xf]
        %v277 = vld [vmem:[#allocation5 + $0x58] sm:$0xf]
        %v278 = vld [vmem:[#allocation5 + $0x5c] sm:$0xf]
        %v279 = vld [vmem:[#allocation5 + $0x60] sm:$0xf]
        %v280 = vld [vmem:[#allocation5 + $0x64] sm:$0xf]
        %v281 = vld [vmem:[#allocation5 + $0x68] sm:$0xf]
        %v282 = vld [vmem:[#allocation5 + $0x6c] sm:$0xf]
        %v283 = vld [vmem:[#allocation5 + $0x70] sm:$0xf]
        %v284 = vld [vmem:[#allocation5 + $0x74] sm:$0xf]
        %v285 = vld [vmem:[#allocation5 + $0x78] sm:$0xf]
        %v286 = vld [vmem:[#allocation5 + $0x7c] sm:$0xf]
        %v287 = vld [vmem:[#allocation5 + $0x80] sm:$0xf]
        %v288 = vld [vmem:[#allocation5 + $0x84] sm:$0xf]
        %v289 = vld [vmem:[#allocation5 + $0x88] sm:$0xf]
        %v290 = vld [vmem:[#allocation5 + $0x8c] sm:$0xf]
        %v291 = vld [vmem:[#allocation5 + $0x90] sm:$0xf]
        %v292 = vld [vmem:[#allocation5 + $0x94] sm:$0xf]
        %v293 = vld [vmem:[#allocation5 + $0x98] sm:$0xf]
        %v294 = vld [vmem:[#allocation5 + $0x9c] sm:$0xf]
        %v295 = vld [vmem:[#allocation5 + $0xa0] sm:$0xf]
        %v296 = vld [vmem:[#allocation5 + $0xa4] sm:$0xf]
        %v297 = vld [vmem:[#allocation5 + $0xa8] sm:$0xf]
        %v298 = vld [vmem:[#allocation5 + $0xac] sm:$0xf]
        %v299 = vld [vmem:[#allocation5 + $0xb0] sm:$0xf]
        %v300 = vld [vmem:[#allocation5 + $0xb4] sm:$0xf]
        %v301 = vld [vmem:[#allocation5 + $0xb8] sm:$0xf]
        %v302 = vld [vmem:[#allocation5 + $0xbc] sm:$0xf]
        %v303 = vld [vmem:[#allocation5 + $0xc0] sm:$0xf]
        %v304 = vld [vmem:[#allocation5 + $0xc4] sm:$0xf]
        %v305 = vld [vmem:[#allocation5 + $0xc8] sm:$0xf]
        %v306 = vld [vmem:[#allocation5 + $0xcc] sm:$0xf]
        %v307 = vld [vmem:[#allocation5 + $0xd0] sm:$0xf]
        %v308 = vld [vmem:[#allocation5 + $0xd4] sm:$0xf]
        %v309 = vld [vmem:[#allocation5 + $0xd8] sm:$0xf]
        %v310 = vld [vmem:[#allocation5 + $0xdc] sm:$0xf]
        %v311 = vld [vmem:[#allocation5 + $0xe0] sm:$0xf]
        %v312 = vld [vmem:[#allocation5 + $0xe4] sm:$0xf]
        %v313 = vld [vmem:[#allocation5 + $0xe8] sm:$0xf]
        %v314 = vld [vmem:[#allocation5 + $0xec] sm:$0xf]
        %v315 = vld [vmem:[#allocation5 + $0xf0] sm:$0xf]
        %v316 = vld [vmem:[#allocation5 + $0xf4] sm:$0xf]
        %v317 = vld [vmem:[#allocation5 + $0xf8] sm:$0xf]
        %v318 = vld [vmem:[#allocation5 + $0xfc] sm:$0xf]
        %v319 = vld [vmem:[#allocation5 + $0x100] sm:$0xf]
        %v320 = vld [vmem:[#allocation5 + $0x104] sm:$0xf]
        %v321 = vld [vmem:[#allocation5 + $0x108] sm:$0xf]
        %v322 = vld [vmem:[#allocation5 + $0x10c] sm:$0xf]
        %v323 = vld [vmem:[#allocation5 + $0x110] sm:$0xf]
        %v324 = vld [vmem:[#allocation5 + $0x114] sm:$0xf]
        %v325 = vld [vmem:[#allocation5 + $0x118] sm:$0xf]
        %v326 = vld [vmem:[#allocation5 + $0x11c] sm:$0xf]
        %v327 = vld [vmem:[#allocation5 + $0x120] sm:$0xf]
        %v328 = vld [vmem:[#allocation5 + $0x124] sm:$0xf]
        %v329 = vld [vmem:[#allocation5 + $0x128] sm:$0xf]
        %v330 = vld [vmem:[#allocation5 + $0x12c] sm:$0xf]
        %v331 = vld [vmem:[#allocation5 + $0x130] sm:$0xf]
        %v332 = vld [vmem:[#allocation5 + $0x134] sm:$0xf]
        %v333 = vld [vmem:[#allocation5 + $0x138] sm:$0xf]
        %v334 = vld [vmem:[#allocation5 + $0x13c] sm:$0xf]
        %v335 = vld [vmem:[#allocation5 + $0x140] sm:$0xf]
        %v336 = vld [vmem:[#allocation5 + $0x144] sm:$0xf]
        %v337 = vld [vmem:[#allocation5 + $0x148] sm:$0xf]
        %v338 = vld [vmem:[#allocation5 + $0x14c] sm:$0xf]
        %v339 = vld [vmem:[#allocation5 + $0x150] sm:$0xf]
        %v340 = vld [vmem:[#allocation5 + $0x154] sm:$0xf]
        %v341 = vld [vmem:[#allocation5 + $0x158] sm:$0xf]
        %v342 = vld [vmem:[#allocation5 + $0x15c] sm:$0xf]
        %v343 = vld [vmem:[#allocation5 + $0x160] sm:$0xf]
        %v344 = vld [vmem:[#allocation5 + $0x164] sm:$0xf]
        %v345 = vld [vmem:[#allocation5 + $0x168] sm:$0xf]
        %v346 = vld [vmem:[#allocation5 + $0x16c] sm:$0xf]
        %v347 = vld [vmem:[#allocation5 + $0x170] sm:$0xf]
        %v348 = vld [vmem:[#allocation5 + $0x174] sm:$0xf]
        %v349 = vld [vmem:[#allocation5 + $0x178] sm:$0xf]
        %v350 = vld [vmem:[#allocation5 + $0x17c] sm:$0xf]
        %v351 = vld [vmem:[#allocation7] sm:$0xff]
        %v352 = vld [vmem:[#allocation7 + $0x8] sm:$0xff]
        %v359 = vunpack.c.l.b16 %v249
        %v360 = vunpack.c.h.b16 %v249
        %v361 = vunpack.c.l.b16 %v250
        %v362 = vunpack.c.h.b16 %v250
        %v363 = vunpack.c.l.b16 %v251
        %v364 = vunpack.c.h.b16 %v251
        %v365 = vunpack.c.l.b16 %v252
        %v366 = vunpack.c.h.b16 %v252
        %v367 = vunpack.c.l.b16 %v253
        %v368 = vunpack.c.h.b16 %v253
        %v369 = vunpack.c.l.b16 %v254
        %v370 = vunpack.c.h.b16 %v254
        %v371 = vpack.c.b16 %v365, %v359
        %v372 = vpack.c.b16 %v366, %v360
        %v373 = vpack.c.b16 %v367, %v361
        %v374 = vpack.c.b16 %v368, %v362
        %v375 = vpack.c.b16 %v369, %v363
        %v376 = vpack.c.b16 %v370, %v364
        %v479 = vunpack.c.l.b16 %v255
        %v480 = vunpack.c.l.b16 %v256
        %v481 = vunpack.c.l.b16 %v257
        %v482 = vunpack.c.l.b16 %v258
        %v483 = vunpack.c.l.b16 %v259
        %v484 = vunpack.c.l.b16 %v260
        %v485 = vunpack.c.l.b16 %v261
        %v486 = vunpack.c.l.b16 %v262
        %v487 = vunpack.c.l.b16 %v263
        %v488 = vunpack.c.l.b16 %v264
        %v489 = vunpack.c.l.b16 %v265
        %v490 = vunpack.c.l.b16 %v266
        %v491 = vunpack.c.l.b16 %v267
        %v492 = vunpack.c.l.b16 %v268
        %v493 = vunpack.c.l.b16 %v269
        %v494 = vunpack.c.l.b16 %v270
        %v495 = vunpack.c.l.b16 %v271
        %v496 = vunpack.c.l.b16 %v272
        %v497 = vunpack.c.l.b16 %v273
        %v498 = vunpack.c.l.b16 %v274
        %v499 = vunpack.c.l.b16 %v275
        %v500 = vunpack.c.l.b16 %v276
        %v501 = vunpack.c.l.b16 %v277
        %v502 = vunpack.c.l.b16 %v278
        %v503 = vunpack.c.l.b16 %v279
        %v504 = vunpack.c.l.b16 %v280
        %v505 = vunpack.c.l.b16 %v281
        %v506 = vunpack.c.l.b16 %v282
        %v507 = vunpack.c.l.b16 %v283
        %v508 = vunpack.c.l.b16 %v284
        %v509 = vunpack.c.l.b16 %v285
        %v510 = vunpack.c.l.b16 %v286
        %v511 = vunpack.c.l.b16 %v287
        %v512 = vunpack.c.l.b16 %v288
        %v513 = vunpack.c.l.b16 %v289
        %v514 = vunpack.c.l.b16 %v290
        %v515 = vunpack.c.l.b16 %v291
        %v516 = vunpack.c.l.b16 %v292
        %v517 = vunpack.c.l.b16 %v293
        %v518 = vunpack.c.l.b16 %v294
        %v519 = vunpack.c.l.b16 %v295
        %v520 = vunpack.c.l.b16 %v296
        %v521 = vunpack.c.l.b16 %v297
        %v522 = vunpack.c.l.b16 %v298
        %v523 = vunpack.c.l.b16 %v299
        %v524 = vunpack.c.l.b16 %v300
        %v525 = vunpack.c.l.b16 %v301
        %v526 = vunpack.c.l.b16 %v302
        %v527 = vunpack.c.l.b16 %v303
        %v528 = vunpack.c.l.b16 %v304
        %v529 = vunpack.c.l.b16 %v305
        %v530 = vunpack.c.l.b16 %v306
        %v531 = vunpack.c.l.b16 %v307
        %v532 = vunpack.c.l.b16 %v308
        %v533 = vunpack.c.l.b16 %v309
        %v534 = vunpack.c.l.b16 %v310
        %v535 = vunpack.c.l.b16 %v311
        %v536 = vunpack.c.l.b16 %v312
        %v537 = vunpack.c.l.b16 %v313
        %v538 = vunpack.c.l.b16 %v314
        %v539 = vunpack.c.l.b16 %v315
        %v540 = vunpack.c.l.b16 %v316
        %v541 = vunpack.c.l.b16 %v317
        %v542 = vunpack.c.l.b16 %v318
        %v543 = vunpack.c.l.b16 %v319
        %v544 = vunpack.c.l.b16 %v320
        %v545 = vunpack.c.l.b16 %v321
        %v546 = vunpack.c.l.b16 %v322
        %v547 = vunpack.c.l.b16 %v323
        %v548 = vunpack.c.l.b16 %v324
        %v549 = vunpack.c.l.b16 %v325
        %v550 = vunpack.c.l.b16 %v326
        %v551 = vunpack.c.l.b16 %v327
        %v552 = vunpack.c.l.b16 %v328
        %v553 = vunpack.c.l.b16 %v329
        %v554 = vunpack.c.l.b16 %v330
        %v555 = vunpack.c.l.b16 %v331
        %v556 = vunpack.c.l.b16 %v332
        %v557 = vunpack.c.l.b16 %v333
        %v558 = vunpack.c.l.b16 %v334
        %v559 = vunpack.c.l.b16 %v335
        %v560 = vunpack.c.l.b16 %v336
        %v561 = vunpack.c.l.b16 %v337
        %v562 = vunpack.c.l.b16 %v338
        %v563 = vunpack.c.l.b16 %v339
        %v564 = vunpack.c.l.b16 %v340
        %v565 = vunpack.c.l.b16 %v341
        %v566 = vunpack.c.l.b16 %v342
        %v567 = vunpack.c.l.b16 %v343
        %v568 = vunpack.c.l.b16 %v344
        %v569 = vunpack.c.l.b16 %v345
        %v570 = vunpack.c.l.b16 %v346
        %v571 = vunpack.c.l.b16 %v347
        %v572 = vunpack.c.l.b16 %v348
        %v573 = vunpack.c.l.b16 %v349
        %v574 = vunpack.c.l.b16 %v350
        %v575 = vpack.c.b16 %v480, %v479
        %v576 = vpack.c.b16 %v482, %v481
        %v577 = vpack.c.b16 %v484, %v483
        %v578 = vpack.c.b16 %v486, %v485
        %v579 = vpack.c.b16 %v488, %v487
        %v580 = vpack.c.b16 %v490, %v489
        %v581 = vpack.c.b16 %v492, %v491
        %v582 = vpack.c.b16 %v494, %v493
        %v583 = vpack.c.b16 %v496, %v495
        %v584 = vpack.c.b16 %v498, %v497
        %v585 = vpack.c.b16 %v500, %v499
        %v586 = vpack.c.b16 %v502, %v501
        %v587 = vpack.c.b16 %v504, %v503
        %v588 = vpack.c.b16 %v506, %v505
        %v589 = vpack.c.b16 %v508, %v507
        %v590 = vpack.c.b16 %v510, %v509
        %v591 = vpack.c.b16 %v512, %v511
        %v592 = vpack.c.b16 %v514, %v513
        %v593 = vpack.c.b16 %v516, %v515
        %v594 = vpack.c.b16 %v518, %v517
        %v595 = vpack.c.b16 %v520, %v519
        %v596 = vpack.c.b16 %v522, %v521
        %v597 = vpack.c.b16 %v524, %v523
        %v598 = vpack.c.b16 %v526, %v525
        %v599 = vpack.c.b16 %v528, %v527
        %v600 = vpack.c.b16 %v530, %v529
        %v601 = vpack.c.b16 %v532, %v531
        %v602 = vpack.c.b16 %v534, %v533
        %v603 = vpack.c.b16 %v536, %v535
        %v604 = vpack.c.b16 %v538, %v537
        %v605 = vpack.c.b16 %v540, %v539
        %v606 = vpack.c.b16 %v542, %v541
        %v607 = vpack.c.b16 %v544, %v543
        %v608 = vpack.c.b16 %v546, %v545
        %v609 = vpack.c.b16 %v548, %v547
        %v610 = vpack.c.b16 %v550, %v549
        %v611 = vpack.c.b16 %v552, %v551
        %v612 = vpack.c.b16 %v554, %v553
        %v613 = vpack.c.b16 %v556, %v555
        %v614 = vpack.c.b16 %v558, %v557
        %v615 = vpack.c.b16 %v560, %v559
        %v616 = vpack.c.b16 %v562, %v561
        %v617 = vpack.c.b16 %v564, %v563
        %v618 = vpack.c.b16 %v566, %v565
        %v619 = vpack.c.b16 %v568, %v567
        %v620 = vpack.c.b16 %v570, %v569
        %v621 = vpack.c.b16 %v572, %v571
        %v622 = vpack.c.b16 %v574, %v573
        %671 = vmatprep.subr.bf16.mxu0 0
        %672 = vmatpush1.bf16.msra.mxu0 %v575
        %673 = vmatprep.subr.bf16.mxu0 0
        %674 = vmatpush1.bf16.msra.mxu0 %v576
        %675 = vmatprep.subr.bf16.mxu0 0
        %676 = vmatpush1.bf16.msra.mxu0 %v577
        %677 = vmatprep.subr.bf16.mxu0 0
        %678 = vmatpush1.bf16.msra.mxu0 %v578
        %679 = vmatprep.subr.bf16.mxu0 0
        %680 = vmatpush1.bf16.msra.mxu0 %v579
        %681 = vmatprep.subr.bf16.mxu0 0
        %682 = vmatpush1.bf16.msra.mxu0 %v580
        %683 = vmatprep.subr.bf16.mxu0 0
        %684 = vmatpush1.bf16.msra.mxu0 %v581
        %685 = vmatprep.subr.bf16.mxu0 0
        %686 = vmatpush1.bf16.msra.mxu0 %v582
        %687 = vmatprep.subr.bf16.mxu0 0
        %688 = vmatpush1.bf16.msra.mxu0 %v583
        %689 = vmatprep.subr.bf16.mxu0 0
        %690 = vmatpush1.bf16.msra.mxu0 %v584
        %691 = vmatprep.subr.bf16.mxu0 0
        %692 = vmatpush1.bf16.msra.mxu0 %v585
        %693 = vmatprep.subr.bf16.mxu0 0
        %694 = vmatpush1.bf16.msra.mxu0 %v586
        %695 = vmatprep.subr.bf16.mxu0 0
        %696 = vmatpush1.bf16.msra.mxu0 %v587
        %697 = vmatprep.subr.bf16.mxu0 0
        %698 = vmatpush1.bf16.msra.mxu0 %v588
        %699 = vmatprep.subr.bf16.mxu0 0
        %700 = vmatpush1.bf16.msra.mxu0 %v589
        %701 = vmatprep.subr.bf16.mxu0 0
        %702 = vmatpush1.bf16.msra.mxu0 %v590
        %703 = vmatprep.mubr.bf16.mxu0 %v372
        %704 = vmatmul.mubr.bf16.gmra.mrb[0].mxu0 %v371
        %v705 = vpop.f32.mrb[0].mxu0
        %v706 = vadd.f32 %v351, %v705
        %v707 = vpop.f32.mrb[0].mxu0
        %v708 = vpop.f32.mrb[0].mxu0
        %v709 = vadd.f32 %v352, %v708
        %v710 = vpop.f32.mrb[0].mxu0
        %711 = vdwg.mxu0
        %712 = vmatprep.subr.bf16.mxu0 0
        %713 = vmatpush1.bf16.msra.mxu0 %v591
        %714 = vmatprep.subr.bf16.mxu0 0
        %715 = vmatpush1.bf16.msra.mxu0 %v592
        %716 = vmatprep.subr.bf16.mxu0 0
        %717 = vmatpush1.bf16.msra.mxu0 %v593
        %718 = vmatprep.subr.bf16.mxu0 0
        %719 = vmatpush1.bf16.msra.mxu0 %v594
        %720 = vmatprep.subr.bf16.mxu0 0
        %721 = vmatpush1.bf16.msra.mxu0 %v595
        %722 = vmatprep.subr.bf16.mxu0 0
        %723 = vmatpush1.bf16.msra.mxu0 %v596
        %724 = vmatprep.subr.bf16.mxu0 0
        %725 = vmatpush1.bf16.msra.mxu0 %v597
        %726 = vmatprep.subr.bf16.mxu0 0
        %727 = vmatpush1.bf16.msra.mxu0 %v598
        %728 = vmatprep.subr.bf16.mxu0 0
        %729 = vmatpush1.bf16.msra.mxu0 %v599
        %730 = vmatprep.subr.bf16.mxu0 0
        %731 = vmatpush1.bf16.msra.mxu0 %v600
        %732 = vmatprep.subr.bf16.mxu0 0
        %733 = vmatpush1.bf16.msra.mxu0 %v601
        %734 = vmatprep.subr.bf16.mxu0 0
        %735 = vmatpush1.bf16.msra.mxu0 %v602
        %736 = vmatprep.subr.bf16.mxu0 0
        %737 = vmatpush1.bf16.msra.mxu0 %v603
        %738 = vmatprep.subr.bf16.mxu0 0
        %739 = vmatpush1.bf16.msra.mxu0 %v604
        %740 = vmatprep.subr.bf16.mxu0 0
        %741 = vmatpush1.bf16.msra.mxu0 %v605
        %742 = vmatprep.subr.bf16.mxu0 0
        %743 = vmatpush1.bf16.msra.mxu0 %v606
        %744 = vmatprep.mubr.bf16.mxu0 %v374
        %745 = vmatmul.mubr.bf16.gmra.mrb[0].mxu0 %v373
        %v746 = vpop.f32.mrb[0].mxu0
        %v747 = vadd.f32 %v706, %v746
        %v748 = vpop.f32.mrb[0].mxu0
        %v749 = vpop.f32.mrb[0].mxu0
        %v750 = vadd.f32 %v709, %v749
        %v751 = vpop.f32.mrb[0].mxu0
        %752 = vdwg.mxu0
        %753 = vmatprep.subr.bf16.mxu0 0
        %754 = vmatpush1.bf16.msra.mxu0 %v607
        %755 = vmatprep.subr.bf16.mxu0 0
        %756 = vmatpush1.bf16.msra.mxu0 %v608
        %757 = vmatprep.subr.bf16.mxu0 0
        %758 = vmatpush1.bf16.msra.mxu0 %v609
        %759 = vmatprep.subr.bf16.mxu0 0
        %760 = vmatpush1.bf16.msra.mxu0 %v610
        %761 = vmatprep.subr.bf16.mxu0 0
        %762 = vmatpush1.bf16.msra.mxu0 %v611
        %763 = vmatprep.subr.bf16.mxu0 0
        %764 = vmatpush1.bf16.msra.mxu0 %v612
        %765 = vmatprep.subr.bf16.mxu0 0
        %766 = vmatpush1.bf16.msra.mxu0 %v613
        %767 = vmatprep.subr.bf16.mxu0 0
        %768 = vmatpush1.bf16.msra.mxu0 %v614
        %769 = vmatprep.subr.bf16.mxu0 0
        %770 = vmatpush1.bf16.msra.mxu0 %v615
        %771 = vmatprep.subr.bf16.mxu0 0
        %772 = vmatpush1.bf16.msra.mxu0 %v616
        %773 = vmatprep.subr.bf16.mxu0 0
        %774 = vmatpush1.bf16.msra.mxu0 %v617
        %775 = vmatprep.subr.bf16.mxu0 0
        %776 = vmatpush1.bf16.msra.mxu0 %v618
        %777 = vmatprep.subr.bf16.mxu0 0
        %778 = vmatpush1.bf16.msra.mxu0 %v619
        %779 = vmatprep.subr.bf16.mxu0 0
        %780 = vmatpush1.bf16.msra.mxu0 %v620
        %781 = vmatprep.subr.bf16.mxu0 0
        %782 = vmatpush1.bf16.msra.mxu0 %v621
        %783 = vmatprep.subr.bf16.mxu0 0
        %784 = vmatpush1.bf16.msra.mxu0 %v622
        %785 = vmatprep.mubr.bf16.mxu0 %v376
        %786 = vmatmul.mubr.bf16.gmra.mrb[0].mxu0 %v375
        %v787 = vpop.f32.mrb[0].mxu0
        %v788 = vadd.f32 %v747, %v787
        %v789 = vpop.f32.mrb[0].mxu0
        %v790 = vpop.f32.mrb[0].mxu0
        %v791 = vadd.f32 %v750, %v790
        %v792 = vpop.f32.mrb[0].mxu0
        %793 = vdwg.mxu0
        %794 = vst [vmem:[%s244] sm:$0xff] %v788
        %795 = vst [vmem:[%s244 + $0x8] sm:$0xff] %v791
        %s796 = sand.u32 %s118, 1
        %s797 = scalar_lea.sflag [#allocation4], %s796
        %s798 = sand.u32 %s118, 1
        %s799 = smul.addr %s798, 16
        %s800 = scalar_lea.vmem [#allocation8], %s799
        // Predicated region
        $region45: #{tpu_custom_call.1} parent=31 // pred_check
          %p801 = pneg %p128
        $region46: #{tpu_custom_call.1} parent=31 // pred_check_branch
          %803 = sbr.rel (%p801) target = $region48
        $region47: #{tpu_custom_call.1} parent=31 // pred_region
          %s804 = smul.u32 2, %s26
          %s806 = ssub.s32 256, 256
          %807 = vsyncadd %s797, %s806
          %s808 = smul.addr %s25, 2
          %s809 = sadd.s32 %s804, %s808
          %s810 = smul.addr %s809, 128
          %s811 = scalar_lea.hbm %s3, %s810
          %s812 = sshll.u32 %s800, 4
          %s813 = int_to_ptr.vmem [resolvable:$true] %s812
          %818 = dma.vmem_to_hbm [thread:$0]  %s813, 256, %s811, %s797, 128, 128, 8
        $region48: #{tpu_custom_call.1} parent=31 // pred_fallthru
          _
      $region32: #{tpu_custom_call.1} parent=5 // pred_fallthru
        _
      %p819 = scmp.le.s32.totalorder 2, %s16
      // Predicated region
      $region49: #{tpu_custom_call.1} parent=5 // pred_check
        %p820 = pneg %p819
      $region50: #{tpu_custom_call.1} parent=5 // pred_check_branch
        %822 = sbr.rel (%p820) target = $region52
      $region51: #{tpu_custom_call.1} parent=5 // pred_region
        %s823 = ssub.s32 %s16, 2
        // Predicated region
        $region53: #{tpu_custom_call.1} parent=51 // pred_check
          %p824 = pneg %p134
        $region54: #{tpu_custom_call.1} parent=51 // pred_check_branch
          %826 = sbr.rel (%p824) target = $region56
        $region55: #{tpu_custom_call.1} parent=51 // pred_region
          %s827 = sand.u32 %s119, 1
          %s828 = scalar_lea.sflag [#allocation4], %s827
          %s829 = sand.u32 %s119, 1
          %s830 = smul.addr %s829, 16
          %s831 = scalar_lea.vmem [#allocation8], %s830
          %832 = dma.done %s828, 256
        $region56: #{tpu_custom_call.1} parent=51 // pred_fallthru
          _
      $region52: #{tpu_custom_call.1} parent=5 // pred_fallthru
        _
    $region6: #{tpu_custom_call.1} parent=1 // loop_footer
      %s20 = sadd.s32 1, %s16
    $region7: #{tpu_custom_call.1} parent=1 // loop_footer_branch
      %15 = sbr.rel target = $region3
    $region8: #{tpu_custom_call.1} parent=1 // loop_exit
      _
    %833 = vsyncpa [#allocation3], 1
    %s834 = scalar_lea.sflag [#allocation3], 1
    %835 = vsyncpa %s834, 1
    %836 = vsyncpa [#allocation6], 1
    %837 = vsyncpa [#allocation4], 1
    %s838 = scalar_lea.sflag [#allocation4], 1
    %839 = vsyncpa %s838, 1

// kernel: tpu_custom_call.1
$region0: #{tpu_custom_call.1}
  #allocation0 [shape = 'u32[]', space=smem, size = 0x4, offset = 0x4, fixed_abs, tag = 'smem constant byte address 0x4 - core index']
  #allocation1 [shape = 'u32[144,128]{1,0:T(1,128)}', space=vmem, size = 0x12000, scoped, tag = 'internal scratch']
  %s0 = inlined_call_operand.hbm [shape: bf16[2,16,768], index: 0, kind: input, shape index: {}]
  %s1 = inlined_call_operand.hbm [shape: bf16[768,128], index: 1, kind: input, shape index: {}]
  %s2 = inlined_call_operand.hbm [shape: f32[16,128], index: 2, kind: input, shape index: {}]
  %s3 = inlined_call_operand.hbm [shape: f32[2,16,128], index: 3, kind: output, shape index: {}]
  %s4 = sld [smem:[#allocation0]]
  $region57: #{tpu_custom_call.1} parent=0
    _
  %s6 = ssub.s32 1, %s4
  %s7 = scalar_select 0, %s6, %s4
  $region1: #{tpu_custom_call.1} parent=0
    #allocation2 [shape = 'u8[49152]{0}', space=vmem, size = 0xc000, scoped, tag = 'input window, operand 0']
    #allocation3 [shape = 's32[2]{0}', space=sflag, size = 0x8, scoped, tag = 'scoped memory for tpu_custom_call.1']
    #allocation4 [shape = 's32[2]{0}', space=sflag, size = 0x8, scoped, tag = 'scoped memory for tpu_custom_call.1']
    #allocation5 [shape = 'u8[196608]{0}', space=vmem, size = 0x30000, scoped, tag = 'input window, operand 1, single buffered']
    #allocation6 [shape = 's32[1]{0}', space=sflag, size = 0x4, scoped, tag = 'scoped memory for tpu_custom_call.1']
    #allocation7 [shape = 'u8[8192]{0}', space=vmem, size = 0x2000, scoped, tag = 'input window, operand 2, single buffered']
    #allocation8 [shape = 'u8[16384]{0}', space=vmem, size = 0x4000, scoped, tag = 'output window, operand 0']
    %8 = vsyncpa [#allocation3], 0
    %s9 = scalar_lea.sflag [#allocation3], 1
    %10 = vsyncpa %s9, 0
    %11 = vsyncpa [#allocation6], 0
    %12 = vsyncpa [#allocation4], 0
    %s13 = scalar_lea.sflag [#allocation4], 1
    %14 = vsyncpa %s13, 0
    loop: start=0, step=1, limit=4
    $region2: #{tpu_custom_call.1} parent=1 // loop_pre_header
      _
    $region3: #{tpu_custom_call.1} parent=1 // loop_header
      %s16 = sphi 0, %s20
      %p17 = scmp.ge.s32.totalorder %s16, 4
      %s23 = sphi 0, %s35
      %s24 = sphi 0, %s31
      %s25 = sphi 0, %s23
      %s26 = sphi 0, %s24
      %s27 = sphi 0, %s25
      %s28 = sphi 0, %s26
      %s40 = sphi 0, %s42
      %s43 = sphi 0, %s40
      %s44 = sphi 0, %s43
      %s60 = sphi 0, %s44
      %s64 = sphi 0, %s64
      %s66 = sphi 0, %s64
      %s67 = sphi 0, %s66
      %s81 = sphi 0, %s67
      %s87 = sphi 0, %s89
      %s90 = sphi 0, %s87
      %s91 = sphi 0, %s90
      %s107 = sphi 0, %s91
      %s115 = sphi 0, %s117
      %s118 = sphi 0, %s115
      %s119 = sphi 0, %s118
      %s135 = sphi 0, %s119
    $region4: #{tpu_custom_call.1} parent=1 // loop_header_branch
      %19 = sbr.rel (%p17) target = $region8
    $region5: #{tpu_custom_call.1} parent=1 // loop_body
      %s21 = ssub.s32 %s16, 1
      %s22 = ssub.s32 %s16, 2
      %s29 = sadd.s32 1, %s24
      %p30 = scmp.ge.s32.totalorder %s29, 1
      %s31 = scalar_select %p30, 0, %s29
      %s32 = sadd.s32 1, %s23
      %s33 = scalar_select %p30, %s32, %s23
      %p34 = scmp.ge.s32.totalorder %s33, 2
      %s35 = scalar_select %p34, 0, %s33
      %s36 = ssub.s32 %s23, %s35
      %s37 = ssub.s32 %s24, %s31
      %s38 = sor.u32 %s36, %s37
      %p39 = scmp.eq.s32.totalorder %s38, 0
      %s41 = sadd.s32 %s40, 1
      %s42 = scalar_select %p39, %s40, %s41
      %p45 = pneg %p39
      %p46 = scmp.eq.s32.totalorder %s16, 1
      %p47 = por %p45, %p46
      %p48 = scmp.ne.s32.totalorder %s40, %s43
      %p49 = scmp.eq.s32.totalorder %s16, 0
      %p50 = por %p48, %p49
      %p51 = scmp.ne.s32.totalorder %s40, %s43
      %p52 = scmp.eq.s32.totalorder %s21, 1
      %p53 = por %p51, %p52
      %p54 = scmp.ne.s32.totalorder %s43, %s44
      %p55 = scmp.eq.s32.totalorder %s21, 0
      %p56 = por %p54, %p55
      %p57 = scmp.ne.s32.totalorder %s43, %s44
      %p58 = scmp.eq.s32.totalorder %s22, 1
      %p59 = por %p57, %p58
      %p61 = scmp.ne.s32.totalorder %s44, %s60
      %p62 = scmp.eq.s32.totalorder %s22, 0
      %p63 = por %p61, %p62
      %s65 = sadd.s32 %s64, 1
      %p68 = scmp.eq.s32.totalorder %s16, 1
      %p69 = scmp.ne.s32.totalorder %s64, %s66
      %p70 = scmp.eq.s32.totalorder %s16, 0
      %p71 = por %p69, %p70
      %p72 = scmp.ne.s32.totalorder %s64, %s66
      %p73 = scmp.eq.s32.totalorder %s21, 1
      %p74 = por %p72, %p73
      %p75 = scmp.ne.s32.totalorder %s66, %s67
      %p76 = scmp.eq.s32.totalorder %s21, 0
      %p77 = por %p75, %p76
      %p78 = scmp.ne.s32.totalorder %s66, %s67
      %p79 = scmp.eq.s32.totalorder %s22, 1
      %p80 = por %p78, %p79
      %p82 = scmp.ne.s32.totalorder %s67, %s81
      %p83 = scmp.eq.s32.totalorder %s22, 0
      %p84 = por %p82, %p83
      %s85 = ssub.s32 %s24, %s31
      %p86 = scmp.eq.s32.totalorder %s85, 0
      %s88 = sadd.s32 %s87, 1
      %s89 = scalar_select %p86, %s87, %s88
      %p92 = pneg %p86
      %p93 = scmp.eq.s32.totalorder %s16, 1
      %p94 = por %p92, %p93
      %p95 = scmp.ne.s32.totalorder %s87, %s90
      %p96 = scmp.eq.s32.totalorder %s16, 0
      %p97 = por %p95, %p96
      %p98 = scmp.ne.s32.totalorder %s87, %s90
      %p99 = scmp.eq.s32.totalorder %s21, 1
      %p100 = por %p98, %p99
      %p101 = scmp.ne.s32.totalorder %s90, %s91
      %p102 = scmp.eq.s32.totalorder %s21, 0
      %p103 = por %p101, %p102
      %p104 = scmp.ne.s32.totalorder %s90, %s91
      %p105 = scmp.eq.s32.totalorder %s22, 1
      %p106 = por %p104, %p105
      %p108 = scmp.ne.s32.totalorder %s91, %s107
      %p109 = scmp.eq.s32.totalorder %s22, 0
      %p110 = por %p108, %p109
      %s111 = ssub.s32 %s23, %s35
      %s112 = ssub.s32 %s24, %s31
      %s113 = sor.u32 %s111, %s112
      %p114 = scmp.eq.s32.totalorder %s113, 0
      %s116 = sadd.s32 %s115, 1
      %s117 = scalar_select %p114, %s115, %s116
      %p120 = pneg %p114
      %p121 = scmp.eq.s32.totalorder %s16, 1
      %p122 = por %p120, %p121
      %p123 = scmp.ne.s32.totalorder %s115, %s118
      %p124 = scmp.eq.s32.totalorder %s16, 0
      %p125 = por %p123, %p124
      %p126 = scmp.ne.s32.totalorder %s115, %s118
      %p127 = scmp.eq.s32.totalorder %s21, 1
      %p128 = por %p126, %p127
      %p129 = scmp.ne.s32.totalorder %s118, %s119
      %p130 = scmp.eq.s32.totalorder %s21, 0
      %p131 = por %p129, %p130
      %p132 = scmp.ne.s32.totalorder %s118, %s119
      %p133 = scmp.eq.s32.totalorder %s22, 1
      %p134 = por %p132, %p133
      %p136 = scmp.ne.s32.totalorder %s119, %s135
      %p137 = scmp.eq.s32.totalorder %s22, 0
      %p138 = por %p136, %p137
      %p139 = scmp.le.s32.totalorder 1, %s16
      %p140 = scmp.lt.s32.totalorder %s16, 3
      %p141 = pnand %p139, %p140
      %p142 = pneg %p141
      // Predicated region
      $region9: #{tpu_custom_call.1} parent=5 // pred_check
        _
      $region10: #{tpu_custom_call.1} parent=5 // pred_check_branch
        %144 = sbr.rel (%p141) target = $region12
      $region11: #{tpu_custom_call.1} parent=5 // pred_region
        %s145 = ssub.s32 %s16, 1
        // Predicated region
        $region13: #{tpu_custom_call.1} parent=11 // pred_check
          %p146 = pneg %p77
        $region14: #{tpu_custom_call.1} parent=11 // pred_check_branch
          %148 = sbr.rel (%p146) target = $region16
        $region15: #{tpu_custom_call.1} parent=11 // pred_region
          %s150 = ssub.s32 6144, 6144
          %151 = vsyncadd [#allocation6], %s150
          %s152 = sshll.u32 [#allocation5], 4
          %s153 = int_to_ptr.vmem [resolvable:$true] %s152
          %158 = dma.hbm_to_vmem [thread:$0]  %s1, 6144, %s153, [#allocation6], 64, 64, 4
        $region16: #{tpu_custom_call.1} parent=11 // pred_fallthru
          _
        // Predicated region
        $region17: #{tpu_custom_call.1} parent=11 // pred_check
          %p159 = pneg %p103
        $region18: #{tpu_custom_call.1} parent=11 // pred_check_branch
          %161 = sbr.rel (%p159) target = $region20
        $region19: #{tpu_custom_call.1} parent=11 // pred_region
          %s162 = smul.u32 2, %s26
          %s164 = ssub.s32 256, 256
          %165 = vsyncadd [#allocation6], %s164
          %s166 = smul.addr %s162, 128
          %s167 = scalar_lea.hbm %s2, %s166
          %s168 = sshll.u32 [#allocation7], 4
          %s169 = int_to_ptr.vmem [resolvable:$true] %s168
          %174 = dma.hbm_to_vmem [thread:$0]  %s167, 256, %s169, [#allocation6], 128, 128, 8
        $region20: #{tpu_custom_call.1} parent=11 // pred_fallthru
          _
      $region12: #{tpu_custom_call.1} parent=5 // pred_fallthru
        _
      %p175 = scmp.lt.s32.totalorder %s16, 2
      // Predicated region
      $region21: #{tpu_custom_call.1} parent=5 // pred_check
        %p176 = pneg %p175
      $region22: #{tpu_custom_call.1} parent=5 // pred_check_branch
        %178 = sbr.rel (%p176) target = $region24
      $region23: #{tpu_custom_call.1} parent=5 // pred_region
        // Predicated region
        $region25: #{tpu_custom_call.1} parent=23 // pred_check
          %p179 = pneg %p50
        $region26: #{tpu_custom_call.1} parent=23 // pred_check_branch
          %181 = sbr.rel (%p179) target = $region28
        $region27: #{tpu_custom_call.1} parent=23 // pred_region
          %s182 = sand.u32 %s40, 1
          %s183 = scalar_lea.sflag [#allocation3], %s182
          %s184 = sand.u32 %s40, 1
          %s185 = smul.addr %s184, 48
          %s186 = scalar_lea.vmem [#allocation2], %s185
          %s187 = smul.u32 2, %s24
          %s189 = ssub.s32 768, 768
          %190 = vsyncadd %s183, %s189
          %s191 = smul.addr %s187, 6
          %s192 = smul.addr %s23, 12
          %s193 = sadd.s32 %s191, %s192
          %s194 = smul.addr %s193, 64
          %s195 = scalar_lea.hbm %s0, %s194
          %s196 = sshll.u32 %s186, 4
          %s197 = int_to_ptr.vmem [resolvable:$true] %s196
          %202 = dma.hbm_to_vmem [thread:$0]  %s195, 768, %s197, %s183, 384, 384, 24
        $region28: #{tpu_custom_call.1} parent=23 // pred_fallthru
          _
      $region24: #{tpu_custom_call.1} parent=5 // pred_fallthru
        _
      %p203 = scmp.le.s32.totalorder 1, %s16
      %p204 = scmp.lt.s32.totalorder %s16, 3
      %p205 = pnand %p203, %p204
      %p206 = pneg %p205
      // Predicated region
      $region29: #{tpu_custom_call.1} parent=5 // pred_check
        _
      $region30: #{tpu_custom_call.1} parent=5 // pred_check_branch
        %208 = sbr.rel (%p205) target = $region32
      $region31: #{tpu_custom_call.1} parent=5 // pred_region
        %s209 = ssub.s32 %s16, 1
        %s210 = sand.u32 %s43, 1
        %s211 = scalar_lea.sflag [#allocation3], %s210
        %s212 = sand.u32 %s43, 1
        %s213 = smul.addr %s212, 48
        %s214 = scalar_lea.vmem [#allocation2], %s213
        // Predicated region
        $region33: #{tpu_custom_call.1} parent=31 // pred_check
          %p215 = pneg %p56
        $region34: #{tpu_custom_call.1} parent=31 // pred_check_branch
          %217 = sbr.rel (%p215) target = $region36
        $region35: #{tpu_custom_call.1} parent=31 // pred_region
          %218 = dma.done %s211, 768
        $region36: #{tpu_custom_call.1} parent=31 // pred_fallthru
          _
        // Predicated region
        $region37: #{tpu_custom_call.1} parent=31 // pred_check
          %p219 = pneg %p77
        $region38: #{tpu_custom_call.1} parent=31 // pred_check_branch
          %221 = sbr.rel (%p219) target = $region40
        $region39: #{tpu_custom_call.1} parent=31 // pred_region
          %222 = dma.done [#allocation6], 6144
        $region40: #{tpu_custom_call.1} parent=31 // pred_fallthru
          _
        // Predicated region
        $region41: #{tpu_custom_call.1} parent=31 // pred_check
          %p223 = pneg %p103
        $region42: #{tpu_custom_call.1} parent=31 // pred_check_branch
          %225 = sbr.rel (%p223) target = $region44
        $region43: #{tpu_custom_call.1} parent=31 // pred_region
          %226 = dma.done [#allocation6], 256
        $region44: #{tpu_custom_call.1} parent=31 // pred_fallthru
          _
        %s227 = sand.u32 %s43, 1
        %s228 = scalar_lea.sflag [#allocation3], %s227
        %s229 = sand.u32 %s43, 1
        %s230 = smul.addr %s229, 48
        %s231 = scalar_lea.vmem [#allocation2], %s230
        %p232 = pneg %p56
        %p233 = pneg %p53
        %p234 = pneg %p77
        %p235 = pneg %p74
        %p236 = pneg %p103
        %p237 = pneg %p100
        %p238 = pneg %p131
        %p239 = pneg %p128
        %s240 = sand.u32 %s118, 1
        %s241 = scalar_lea.sflag [#allocation4], %s240
        %s242 = sand.u32 %s118, 1
        %s243 = smul.addr %s242, 16
        %s244 = scalar_lea.vmem [#allocation8], %s243
        %s245 = smul.u32 2, %s26
        %s246 = smul.u32 2, %s26
        %s247 = smul.u32 2, %s26
        %v249 = vld [vmem:[%s214] sm:$0xff]
        %v250 = vld [vmem:[%s214 + $0x8] sm:$0xff]
        %v251 = vld [vmem:[%s214 + $0x10] sm:$0xff]
        %v252 = vld [vmem:[%s214 + $0x18] sm:$0xff]
        %v253 = vld [vmem:[%s214 + $0x20] sm:$0xff]
        %v254 = vld [vmem:[%s214 + $0x28] sm:$0xff]
        %v255 = vld [vmem:[#allocation5] sm:$0xf]
        %v256 = vld [vmem:[#allocation5 + $0x4] sm:$0xf]
        %v257 = vld [vmem:[#allocation5 + $0x8] sm:$0xf]
        %v258 = vld [vmem:[#allocation5 + $0xc] sm:$0xf]
        %v259 = vld [vmem:[#allocation5 + $0x10] sm:$0xf]
        %v260 = vld [vmem:[#allocation5 + $0x14] sm:$0xf]
        %v261 = vld [vmem:[#allocation5 + $0x18] sm:$0xf]
        %v262 = vld [vmem:[#allocation5 + $0x1c] sm:$0xf]
        %v263 = vld [vmem:[#allocation5 + $0x20] sm:$0xf]
        %v264 = vld [vmem:[#allocation5 + $0x24] sm:$0xf]
        %v265 = vld [vmem:[#allocation5 + $0x28] sm:$0xf]
        %v266 = vld [vmem:[#allocation5 + $0x2c] sm:$0xf]
        %v267 = vld [vmem:[#allocation5 + $0x30] sm:$0xf]
        %v268 = vld [vmem:[#allocation5 + $0x34] sm:$0xf]
        %v269 = vld [vmem:[#allocation5 + $0x38] sm:$0xf]
        %v270 = vld [vmem:[#allocation5 + $0x3c] sm:$0xf]
        %v271 = vld [vmem:[#allocation5 + $0x40] sm:$0xf]
        %v272 = vld [vmem:[#allocation5 + $0x44] sm:$0xf]
        %v273 = vld [vmem:[#allocation5 + $0x48] sm:$0xf]
        %v274 = vld [vmem:[#allocation5 + $0x4c] sm:$0xf]
        %v275 = vld [vmem:[#allocation5 + $0x50] sm:$0xf]
        %v276 = vld [vmem:[#allocation5 + $0x54] sm:$0xf]
        %v277 = vld [vmem:[#allocation5 + $0x58] sm:$0xf]
        %v278 = vld [vmem:[#allocation5 + $0x5c] sm:$0xf]
        %v279 = vld [vmem:[#allocation5 + $0x60] sm:$0xf]
        %v280 = vld [vmem:[#allocation5 + $0x64] sm:$0xf]
        %v281 = vld [vmem:[#allocation5 + $0x68] sm:$0xf]
        %v282 = vld [vmem:[#allocation5 + $0x6c] sm:$0xf]
        %v283 = vld [vmem:[#allocation5 + $0x70] sm:$0xf]
        %v284 = vld [vmem:[#allocation5 + $0x74] sm:$0xf]
        %v285 = vld [vmem:[#allocation5 + $0x78] sm:$0xf]
        %v286 = vld [vmem:[#allocation5 + $0x7c] sm:$0xf]
        %v287 = vld [vmem:[#allocation5 + $0x80] sm:$0xf]
        %v288 = vld [vmem:[#allocation5 + $0x84] sm:$0xf]
        %v289 = vld [vmem:[#allocation5 + $0x88] sm:$0xf]
        %v290 = vld [vmem:[#allocation5 + $0x8c] sm:$0xf]
        %v291 = vld [vmem:[#allocation5 + $0x90] sm:$0xf]
        %v292 = vld [vmem:[#allocation5 + $0x94] sm:$0xf]
        %v293 = vld [vmem:[#allocation5 + $0x98] sm:$0xf]
        %v294 = vld [vmem:[#allocation5 + $0x9c] sm:$0xf]
        %v295 = vld [vmem:[#allocation5 + $0xa0] sm:$0xf]
        %v296 = vld [vmem:[#allocation5 + $0xa4] sm:$0xf]
        %v297 = vld [vmem:[#allocation5 + $0xa8] sm:$0xf]
        %v298 = vld [vmem:[#allocation5 + $0xac] sm:$0xf]
        %v299 = vld [vmem:[#allocation5 + $0xb0] sm:$0xf]
        %v300 = vld [vmem:[#allocation5 + $0xb4] sm:$0xf]
        %v301 = vld [vmem:[#allocation5 + $0xb8] sm:$0xf]
        %v302 = vld [vmem:[#allocation5 + $0xbc] sm:$0xf]
        %v303 = vld [vmem:[#allocation5 + $0xc0] sm:$0xf]
        %v304 = vld [vmem:[#allocation5 + $0xc4] sm:$0xf]
        %v305 = vld [vmem:[#allocation5 + $0xc8] sm:$0xf]
        %v306 = vld [vmem:[#allocation5 + $0xcc] sm:$0xf]
        %v307 = vld [vmem:[#allocation5 + $0xd0] sm:$0xf]
        %v308 = vld [vmem:[#allocation5 + $0xd4] sm:$0xf]
        %v309 = vld [vmem:[#allocation5 + $0xd8] sm:$0xf]
        %v310 = vld [vmem:[#allocation5 + $0xdc] sm:$0xf]
        %v311 = vld [vmem:[#allocation5 + $0xe0] sm:$0xf]
        %v312 = vld [vmem:[#allocation5 + $0xe4] sm:$0xf]
        %v313 = vld [vmem:[#allocation5 + $0xe8] sm:$0xf]
        %v314 = vld [vmem:[#allocation5 + $0xec] sm:$0xf]
        %v315 = vld [vmem:[#allocation5 + $0xf0] sm:$0xf]
        %v316 = vld [vmem:[#allocation5 + $0xf4] sm:$0xf]
        %v317 = vld [vmem:[#allocation5 + $0xf8] sm:$0xf]
        %v318 = vld [vmem:[#allocation5 + $0xfc] sm:$0xf]
        %v319 = vld [vmem:[#allocation5 + $0x100] sm:$0xf]
        %v320 = vld [vmem:[#allocation5 + $0x104] sm:$0xf]
        %v321 = vld [vmem:[#allocation5 + $0x108] sm:$0xf]
        %v322 = vld [vmem:[#allocation5 + $0x10c] sm:$0xf]
        %v323 = vld [vmem:[#allocation5 + $0x110] sm:$0xf]
        %v324 = vld [vmem:[#allocation5 + $0x114] sm:$0xf]
        %v325 = vld [vmem:[#allocation5 + $0x118] sm:$0xf]
        %v326 = vld [vmem:[#allocation5 + $0x11c] sm:$0xf]
        %v327 = vld [vmem:[#allocation5 + $0x120] sm:$0xf]
        %v328 = vld [vmem:[#allocation5 + $0x124] sm:$0xf]
        %v329 = vld [vmem:[#allocation5 + $0x128] sm:$0xf]
        %v330 = vld [vmem:[#allocation5 + $0x12c] sm:$0xf]
        %v331 = vld [vmem:[#allocation5 + $0x130] sm:$0xf]
        %v332 = vld [vmem:[#allocation5 + $0x134] sm:$0xf]
        %v333 = vld [vmem:[#allocation5 + $0x138] sm:$0xf]
        %v334 = vld [vmem:[#allocation5 + $0x13c] sm:$0xf]
        %v335 = vld [vmem:[#allocation5 + $0x140] sm:$0xf]
        %v336 = vld [vmem:[#allocation5 + $0x144] sm:$0xf]
        %v337 = vld [vmem:[#allocation5 + $0x148] sm:$0xf]
        %v338 = vld [vmem:[#allocation5 + $0x14c] sm:$0xf]
        %v339 = vld [vmem:[#allocation5 + $0x150] sm:$0xf]
        %v340 = vld [vmem:[#allocation5 + $0x154] sm:$0xf]
        %v341 = vld [vmem:[#allocation5 + $0x158] sm:$0xf]
        %v342 = vld [vmem:[#allocation5 + $0x15c] sm:$0xf]
        %v343 = vld [vmem:[#allocation5 + $0x160] sm:$0xf]
        %v344 = vld [vmem:[#allocation5 + $0x164] sm:$0xf]
        %v345 = vld [vmem:[#allocation5 + $0x168] sm:$0xf]
        %v346 = vld [vmem:[#allocation5 + $0x16c] sm:$0xf]
        %v347 = vld [vmem:[#allocation5 + $0x170] sm:$0xf]
        %v348 = vld [vmem:[#allocation5 + $0x174] sm:$0xf]
        %v349 = vld [vmem:[#allocation5 + $0x178] sm:$0xf]
        %v350 = vld [vmem:[#allocation5 + $0x17c] sm:$0xf]
        %v351 = vld [vmem:[#allocation7] sm:$0xff]
        %v352 = vld [vmem:[#allocation7 + $0x8] sm:$0xff]
        %v359 = vunpack.c.l.b16 %v249
        %v360 = vunpack.c.h.b16 %v249
        %v361 = vunpack.c.l.b16 %v250
        %v362 = vunpack.c.h.b16 %v250
        %v363 = vunpack.c.l.b16 %v251
        %v364 = vunpack.c.h.b16 %v251
        %v365 = vunpack.c.l.b16 %v252
        %v366 = vunpack.c.h.b16 %v252
        %v367 = vunpack.c.l.b16 %v253
        %v368 = vunpack.c.h.b16 %v253
        %v369 = vunpack.c.l.b16 %v254
        %v370 = vunpack.c.h.b16 %v254
        %v371 = vpack.c.b16 %v365, %v359
        %v372 = vpack.c.b16 %v366, %v360
        %v373 = vpack.c.b16 %v367, %v361
        %v374 = vpack.c.b16 %v368, %v362
        %v375 = vpack.c.b16 %v369, %v363
        %v376 = vpack.c.b16 %v370, %v364
        %v479 = vunpack.c.l.b16 %v255
        %v480 = vunpack.c.l.b16 %v256
        %v481 = vunpack.c.l.b16 %v257
        %v482 = vunpack.c.l.b16 %v258
        %v483 = vunpack.c.l.b16 %v259
        %v484 = vunpack.c.l.b16 %v260
        %v485 = vunpack.c.l.b16 %v261
        %v486 = vunpack.c.l.b16 %v262
        %v487 = vunpack.c.l.b16 %v263
        %v488 = vunpack.c.l.b16 %v264
        %v489 = vunpack.c.l.b16 %v265
        %v490 = vunpack.c.l.b16 %v266
        %v491 = vunpack.c.l.b16 %v267
        %v492 = vunpack.c.l.b16 %v268
        %v493 = vunpack.c.l.b16 %v269
        %v494 = vunpack.c.l.b16 %v270
        %v495 = vunpack.c.l.b16 %v271
        %v496 = vunpack.c.l.b16 %v272
        %v497 = vunpack.c.l.b16 %v273
        %v498 = vunpack.c.l.b16 %v274
        %v499 = vunpack.c.l.b16 %v275
        %v500 = vunpack.c.l.b16 %v276
        %v501 = vunpack.c.l.b16 %v277
        %v502 = vunpack.c.l.b16 %v278
        %v503 = vunpack.c.l.b16 %v279
        %v504 = vunpack.c.l.b16 %v280
        %v505 = vunpack.c.l.b16 %v281
        %v506 = vunpack.c.l.b16 %v282
        %v507 = vunpack.c.l.b16 %v283
        %v508 = vunpack.c.l.b16 %v284
        %v509 = vunpack.c.l.b16 %v285
        %v510 = vunpack.c.l.b16 %v286
        %v511 = vunpack.c.l.b16 %v287
        %v512 = vunpack.c.l.b16 %v288
        %v513 = vunpack.c.l.b16 %v289
        %v514 = vunpack.c.l.b16 %v290
        %v515 = vunpack.c.l.b16 %v291
        %v516 = vunpack.c.l.b16 %v292
        %v517 = vunpack.c.l.b16 %v293
        %v518 = vunpack.c.l.b16 %v294
        %v519 = vunpack.c.l.b16 %v295
        %v520 = vunpack.c.l.b16 %v296
        %v521 = vunpack.c.l.b16 %v297
        %v522 = vunpack.c.l.b16 %v298
        %v523 = vunpack.c.l.b16 %v299
        %v524 = vunpack.c.l.b16 %v300
        %v525 = vunpack.c.l.b16 %v301
        %v526 = vunpack.c.l.b16 %v302
        %v527 = vunpack.c.l.b16 %v303
        %v528 = vunpack.c.l.b16 %v304
        %v529 = vunpack.c.l.b16 %v305
        %v530 = vunpack.c.l.b16 %v306
        %v531 = vunpack.c.l.b16 %v307
        %v532 = vunpack.c.l.b16 %v308
        %v533 = vunpack.c.l.b16 %v309
        %v534 = vunpack.c.l.b16 %v310
        %v535 = vunpack.c.l.b16 %v311
        %v536 = vunpack.c.l.b16 %v312
        %v537 = vunpack.c.l.b16 %v313
        %v538 = vunpack.c.l.b16 %v314
        %v539 = vunpack.c.l.b16 %v315
        %v540 = vunpack.c.l.b16 %v316
        %v541 = vunpack.c.l.b16 %v317
        %v542 = vunpack.c.l.b16 %v318
        %v543 = vunpack.c.l.b16 %v319
        %v544 = vunpack.c.l.b16 %v320
        %v545 = vunpack.c.l.b16 %v321
        %v546 = vunpack.c.l.b16 %v322
        %v547 = vunpack.c.l.b16 %v323
        %v548 = vunpack.c.l.b16 %v324
        %v549 = vunpack.c.l.b16 %v325
        %v550 = vunpack.c.l.b16 %v326
        %v551 = vunpack.c.l.b16 %v327
        %v552 = vunpack.c.l.b16 %v328
        %v553 = vunpack.c.l.b16 %v329
        %v554 = vunpack.c.l.b16 %v330
        %v555 = vunpack.c.l.b16 %v331
        %v556 = vunpack.c.l.b16 %v332
        %v557 = vunpack.c.l.b16 %v333
        %v558 = vunpack.c.l.b16 %v334
        %v559 = vunpack.c.l.b16 %v335
        %v560 = vunpack.c.l.b16 %v336
        %v561 = vunpack.c.l.b16 %v337
        %v562 = vunpack.c.l.b16 %v338
        %v563 = vunpack.c.l.b16 %v339
        %v564 = vunpack.c.l.b16 %v340
        %v565 = vunpack.c.l.b16 %v341
        %v566 = vunpack.c.l.b16 %v342
        %v567 = vunpack.c.l.b16 %v343
        %v568 = vunpack.c.l.b16 %v344
        %v569 = vunpack.c.l.b16 %v345
        %v570 = vunpack.c.l.b16 %v346
        %v571 = vunpack.c.l.b16 %v347
        %v572 = vunpack.c.l.b16 %v348
        %v573 = vunpack.c.l.b16 %v349
        %v574 = vunpack.c.l.b16 %v350
        %v575 = vpack.c.b16 %v480, %v479
        %v576 = vpack.c.b16 %v482, %v481
        %v577 = vpack.c.b16 %v484, %v483
        %v578 = vpack.c.b16 %v486, %v485
        %v579 = vpack.c.b16 %v488, %v487
        %v580 = vpack.c.b16 %v490, %v489
        %v581 = vpack.c.b16 %v492, %v491
        %v582 = vpack.c.b16 %v494, %v493
        %v583 = vpack.c.b16 %v496, %v495
        %v584 = vpack.c.b16 %v498, %v497
        %v585 = vpack.c.b16 %v500, %v499
        %v586 = vpack.c.b16 %v502, %v501
        %v587 = vpack.c.b16 %v504, %v503
        %v588 = vpack.c.b16 %v506, %v505
        %v589 = vpack.c.b16 %v508, %v507
        %v590 = vpack.c.b16 %v510, %v509
        %v591 = vpack.c.b16 %v512, %v511
        %v592 = vpack.c.b16 %v514, %v513
        %v593 = vpack.c.b16 %v516, %v515
        %v594 = vpack.c.b16 %v518, %v517
        %v595 = vpack.c.b16 %v520, %v519
        %v596 = vpack.c.b16 %v522, %v521
        %v597 = vpack.c.b16 %v524, %v523
        %v598 = vpack.c.b16 %v526, %v525
        %v599 = vpack.c.b16 %v528, %v527
        %v600 = vpack.c.b16 %v530, %v529
        %v601 = vpack.c.b16 %v532, %v531
        %v602 = vpack.c.b16 %v534, %v533
        %v603 = vpack.c.b16 %v536, %v535
        %v604 = vpack.c.b16 %v538, %v537
        %v605 = vpack.c.b16 %v540, %v539
        %v606 = vpack.c.b16 %v542, %v541
        %v607 = vpack.c.b16 %v544, %v543
        %v608 = vpack.c.b16 %v546, %v545
        %v609 = vpack.c.b16 %v548, %v547
        %v610 = vpack.c.b16 %v550, %v549
        %v611 = vpack.c.b16 %v552, %v551
        %v612 = vpack.c.b16 %v554, %v553
        %v613 = vpack.c.b16 %v556, %v555
        %v614 = vpack.c.b16 %v558, %v557
        %v615 = vpack.c.b16 %v560, %v559
        %v616 = vpack.c.b16 %v562, %v561
        %v617 = vpack.c.b16 %v564, %v563
        %v618 = vpack.c.b16 %v566, %v565
        %v619 = vpack.c.b16 %v568, %v567
        %v620 = vpack.c.b16 %v570, %v569
        %v621 = vpack.c.b16 %v572, %v571
        %v622 = vpack.c.b16 %v574, %v573
        %671 = vmatprep.subr.bf16.mxu0 0
        %672 = vmatpush1.bf16.msra.mxu0 %v575
        %673 = vmatprep.subr.bf16.mxu0 0
        %674 = vmatpush1.bf16.msra.mxu0 %v576
        %675 = vmatprep.subr.bf16.mxu0 0
        %676 = vmatpush1.bf16.msra.mxu0 %v577
        %677 = vmatprep.subr.bf16.mxu0 0
        %678 = vmatpush1.bf16.msra.mxu0 %v578
        %679 = vmatprep.subr.bf16.mxu0 0
        %680 = vmatpush1.bf16.msra.mxu0 %v579
        %681 = vmatprep.subr.bf16.mxu0 0
        %682 = vmatpush1.bf16.msra.mxu0 %v580
        %683 = vmatprep.subr.bf16.mxu0 0
        %684 = vmatpush1.bf16.msra.mxu0 %v581
        %685 = vmatprep.subr.bf16.mxu0 0
        %686 = vmatpush1.bf16.msra.mxu0 %v582
        %687 = vmatprep.subr.bf16.mxu0 0
        %688 = vmatpush1.bf16.msra.mxu0 %v583
        %689 = vmatprep.subr.bf16.mxu0 0
        %690 = vmatpush1.bf16.msra.mxu0 %v584
        %691 = vmatprep.subr.bf16.mxu0 0
        %692 = vmatpush1.bf16.msra.mxu0 %v585
        %693 = vmatprep.subr.bf16.mxu0 0
        %694 = vmatpush1.bf16.msra.mxu0 %v586
        %695 = vmatprep.subr.bf16.mxu0 0
        %696 = vmatpush1.bf16.msra.mxu0 %v587
        %697 = vmatprep.subr.bf16.mxu0 0
        %698 = vmatpush1.bf16.msra.mxu0 %v588
        %699 = vmatprep.subr.bf16.mxu0 0
        %700 = vmatpush1.bf16.msra.mxu0 %v589
        %701 = vmatprep.subr.bf16.mxu0 0
        %702 = vmatpush1.bf16.msra.mxu0 %v590
        %703 = vmatprep.mubr.bf16.mxu0 %v372
        %704 = vmatmul.mubr.bf16.gmra.mrb[0].mxu0 %v371
        %v705 = vpop.f32.mrb[0].mxu0
        %v706 = vadd.f32 %v351, %v705
        %v707 = vpop.f32.mrb[0].mxu0
        %v708 = vpop.f32.mrb[0].mxu0
        %v709 = vadd.f32 %v352, %v708
        %v710 = vpop.f32.mrb[0].mxu0
        %711 = vdwg.mxu0
        %712 = vmatprep.subr.bf16.mxu0 0
        %713 = vmatpush1.bf16.msra.mxu0 %v591
        %714 = vmatprep.subr.bf16.mxu0 0
        %715 = vmatpush1.bf16.msra.mxu0 %v592
        %716 = vmatprep.subr.bf16.mxu0 0
        %717 = vmatpush1.bf16.msra.mxu0 %v593
        %718 = vmatprep.subr.bf16.mxu0 0
        %719 = vmatpush1.bf16.msra.mxu0 %v594
        %720 = vmatprep.subr.bf16.mxu0 0
        %721 = vmatpush1.bf16.msra.mxu0 %v595
        %722 = vmatprep.subr.bf16.mxu0 0
        %723 = vmatpush1.bf16.msra.mxu0 %v596
        %724 = vmatprep.subr.bf16.mxu0 0
        %725 = vmatpush1.bf16.msra.mxu0 %v597
        %726 = vmatprep.subr.bf16.mxu0 0
        %727 = vmatpush1.bf16.msra.mxu0 %v598
        %728 = vmatprep.subr.bf16.mxu0 0
        %729 = vmatpush1.bf16.msra.mxu0 %v599
        %730 = vmatprep.subr.bf16.mxu0 0
        %731 = vmatpush1.bf16.msra.mxu0 %v600
        %732 = vmatprep.subr.bf16.mxu0 0
        %733 = vmatpush1.bf16.msra.mxu0 %v601
        %734 = vmatprep.subr.bf16.mxu0 0
        %735 = vmatpush1.bf16.msra.mxu0 %v602
        %736 = vmatprep.subr.bf16.mxu0 0
        %737 = vmatpush1.bf16.msra.mxu0 %v603
        %738 = vmatprep.subr.bf16.mxu0 0
        %739 = vmatpush1.bf16.msra.mxu0 %v604
        %740 = vmatprep.subr.bf16.mxu0 0
        %741 = vmatpush1.bf16.msra.mxu0 %v605
        %742 = vmatprep.subr.bf16.mxu0 0
        %743 = vmatpush1.bf16.msra.mxu0 %v606
        %744 = vmatprep.mubr.bf16.mxu0 %v374
        %745 = vmatmul.mubr.bf16.gmra.mrb[0].mxu0 %v373
        %v746 = vpop.f32.mrb[0].mxu0
        %v747 = vadd.f32 %v706, %v746
        %v748 = vpop.f32.mrb[0].mxu0
        %v749 = vpop.f32.mrb[0].mxu0
        %v750 = vadd.f32 %v709, %v749
        %v751 = vpop.f32.mrb[0].mxu0
        %752 = vdwg.mxu0
        %753 = vmatprep.subr.bf16.mxu0 0
        %754 = vmatpush1.bf16.msra.mxu0 %v607
        %755 = vmatprep.subr.bf16.mxu0 0
        %756 = vmatpush1.bf16.msra.mxu0 %v608
        %757 = vmatprep.subr.bf16.mxu0 0
        %758 = vmatpush1.bf16.msra.mxu0 %v609
        %759 = vmatprep.subr.bf16.mxu0 0
        %760 = vmatpush1.bf16.msra.mxu0 %v610
        %761 = vmatprep.subr.bf16.mxu0 0
        %762 = vmatpush1.bf16.msra.mxu0 %v611
        %763 = vmatprep.subr.bf16.mxu0 0
        %764 = vmatpush1.bf16.msra.mxu0 %v612
        %765 = vmatprep.subr.bf16.mxu0 0
        %766 = vmatpush1.bf16.msra.mxu0 %v613
        %767 = vmatprep.subr.bf16.mxu0 0
        %768 = vmatpush1.bf16.msra.mxu0 %v614
        %769 = vmatprep.subr.bf16.mxu0 0
        %770 = vmatpush1.bf16.msra.mxu0 %v615
        %771 = vmatprep.subr.bf16.mxu0 0
        %772 = vmatpush1.bf16.msra.mxu0 %v616
        %773 = vmatprep.subr.bf16.mxu0 0
        %774 = vmatpush1.bf16.msra.mxu0 %v617
        %775 = vmatprep.subr.bf16.mxu0 0
        %776 = vmatpush1.bf16.msra.mxu0 %v618
        %777 = vmatprep.subr.bf16.mxu0 0
        %778 = vmatpush1.bf16.msra.mxu0 %v619
        %779 = vmatprep.subr.bf16.mxu0 0
        %780 = vmatpush1.bf16.msra.mxu0 %v620
        %781 = vmatprep.subr.bf16.mxu0 0
        %782 = vmatpush1.bf16.msra.mxu0 %v621
        %783 = vmatprep.subr.bf16.mxu0 0
        %784 = vmatpush1.bf16.msra.mxu0 %v622
        %785 = vmatprep.mubr.bf16.mxu0 %v376
        %786 = vmatmul.mubr.bf16.gmra.mrb[0].mxu0 %v375
        %v787 = vpop.f32.mrb[0].mxu0
        %v788 = vadd.f32 %v747, %v787
        %v789 = vpop.f32.mrb[0].mxu0
        %v790 = vpop.f32.mrb[0].mxu0
        %v791 = vadd.f32 %v750, %v790
        %v792 = vpop.f32.mrb[0].mxu0
        %793 = vdwg.mxu0
        %794 = vst [vmem:[%s244] sm:$0xff] %v788
        %795 = vst [vmem:[%s244 + $0x8] sm:$0xff] %v791
        %s796 = sand.u32 %s118, 1
        %s797 = scalar_lea.sflag [#allocation4], %s796
        %s798 = sand.u32 %s118, 1
        %s799 = smul.addr %s798, 16
        %s800 = scalar_lea.vmem [#allocation8], %s799
        // Predicated region
        $region45: #{tpu_custom_call.1} parent=31 // pred_check
          %p801 = pneg %p128
        $region46: #{tpu_custom_call.1} parent=31 // pred_check_branch
          %803 = sbr.rel (%p801) target = $region48
        $region47: #{tpu_custom_call.1} parent=31 // pred_region
          %s804 = smul.u32 2, %s26
          %s806 = ssub.s32 256, 256
          %807 = vsyncadd %s797, %s806
          %s808 = smul.addr %s25, 2
          %s809 = sadd.s32 %s804, %s808
          %s810 = smul.addr %s809, 128
          %s811 = scalar_lea.hbm %s3, %s810
          %s812 = sshll.u32 %s800, 4
          %s813 = int_to_ptr.vmem [resolvable:$true] %s812
          %818 = dma.vmem_to_hbm [thread:$0]  %s813, 256, %s811, %s797, 128, 128, 8
        $region48: #{tpu_custom_call.1} parent=31 // pred_fallthru
          _
      $region32: #{tpu_custom_call.1} parent=5 // pred_fallthru
        _
      %p819 = scmp.le.s32.totalorder 2, %s16
      // Predicated region
      $region49: #{tpu_custom_call.1} parent=5 // pred_check
        %p820 = pneg %p819
      $region50: #{tpu_custom_call.1} parent=5 // pred_check_branch
        %822 = sbr.rel (%p820) target = $region52
      $region51: #{tpu_custom_call.1} parent=5 // pred_region
        %s823 = ssub.s32 %s16, 2
        // Predicated region
        $region53: #{tpu_custom_call.1} parent=51 // pred_check
          %p824 = pneg %p134
        $region54: #{tpu_custom_call.1} parent=51 // pred_check_branch
          %826 = sbr.rel (%p824) target = $region56
        $region55: #{tpu_custom_call.1} parent=51 // pred_region
          %s827 = sand.u32 %s119, 1
          %s828 = scalar_lea.sflag [#allocation4], %s827
          %s829 = sand.u32 %s119, 1
          %s830 = smul.addr %s829, 16
          %s831 = scalar_lea.vmem [#allocation8], %s830
          %832 = dma.done %s828, 256
        $region56: #{tpu_custom_call.1} parent=51 // pred_fallthru
          _
      $region52: #{tpu_custom_call.1} parent=5 // pred_fallthru
        _
    $region6: #{tpu_custom_call.1} parent=1 // loop_footer
      %s20 = sadd.s32 1, %s16
    $region7: #{tpu_custom_call.1} parent=1 // loop_footer_branch
      %15 = sbr.rel target = $region3
    $region8: #{tpu_custom_call.1} parent=1 // loop_exit
      _
    %833 = vsyncpa [#allocation3], 1
    %s834 = scalar_lea.sflag [#allocation3], 1
    %835 = vsyncpa %s834, 1
    %836 = vsyncpa [#allocation6], 1
    %837 = vsyncpa [#allocation4], 1
    %s838 = scalar_lea.sflag [#allocation4], 1
    %839 = vsyncpa %s838, 1

</llo_original>
